<compile_context>
chip_gen: v7x
topology: tpu7x:2x2x1
jax: 0.10.0
libtpu: 0.0.40
codegen_flags: <defaults>
</compile_context>

<pallas_src>
import functools
import math

import jax
import jax.numpy as jnp
from jax.experimental import pallas as pl
from jax.experimental.pallas import tpu as pltpu


def _round_up(x, m):
    return ((x + m - 1) // m) * m


def _phase_chunking(D):
    """Padded phase dim and static chunk size along D (lane-aligned when D>=128)."""
    if D >= 128:
        return _round_up(D, 128), 128
    d = _round_up(D, 8)
    return d, d


def _vmem_capacity_bytes():
    try:
        info = pltpu.get_tpu_info()
        cap = getattr(info, "vmem_capacity_bytes", None)
        if cap:
            return int(cap)
    except Exception:
        pass
    return 64 * 1024 * 1024          # conservative (v7x-sized) fallback


def _vmem_est(tile_b, d_pad, d_chunk, tile_n):
    tails = 2 * 2 * d_pad * tile_n * 4          # tail pack tiles (double-buffered)
    outs = 2 * tile_b * tile_n * 4              # output tiles (double-buffered)
    qpk = 2 * 5 * tile_b * d_pad * 4            # query pack (double-buffered)
    chunk = 4 * tile_b * d_chunk * tile_n * 4   # rank-3 phase temporaries per chunk
    sincos = 2 * d_chunk * tile_n * 4           # sin/cos of the tail chunk
    mm = (d_pad * tile_n + 3 * tile_b * tile_n) * 4   # mt^2, matmul results, accum
    return tails + outs + qpk + chunk + sincos + mm


def _hake_kernel(q_ref, tail_ref, o_ref, *, gamma, phase_w, mod_w,
                 d_chunk, n_chunks):
    # q_ref    : (5, TB, Dp) packed query tile:
    #            [sin(a/2), cos(a/2), -2*hm*omb, omb^2, hm^2]
    #            a = (phase_head+phase_rel)/scale, hm = mod_head*(mod_rel+bias),
    #            omb = 1 - bias.
    # tail_ref : (2, Dp, TN) packed tail tile: [phase_tail/scale ; mod_tail],
    #            entity axis on lanes.
    # o_ref    : (TB, TN)   sigmoid(gamma - (phase_w*phase + mod_w*modulus))
    tb = q_ref.shape[1]
    tn = tail_ref.shape[2]

    mt = tail_ref[1]                                      # (Dp, TN)

    # ---- modulus on the MXU ------------------------------------------------
    # ||hm - mt*omb||^2 = sum hm^2 + (-2*hm*omb)@mt + (omb^2)@(mt^2)
    # NOTE: expanded quadratic may cancel near zero; clamp before sqrt.
    c0 = jnp.sum(q_ref[4], axis=-1, keepdims=True)        # (TB, 1)
    modsq = (c0
             + jnp.dot(q_ref[2], mt, preferred_element_type=jnp.float32)
             + jnp.dot(q_ref[3], mt * mt, preferred_element_type=jnp.float32))
    r_score = jnp.sqrt(jnp.maximum(modsq, 0.0))           # (TB, TN)

    # ---- phase: sum_d |sin((a - pt)/2)| via angle-difference identity ------
    # sin((a-pt)/2) = sin(a/2)cos(pt/2) - cos(a/2)sin(pt/2)
    # D-chunked so the rank-3 temporary is only (TB, d_chunk, TN).
    # TODO(synk): on v6e/v7x the broadcast arithmetic could run in bf16 (2x VPU);
    # kept f32 for cross-generation accuracy.
    sin_a = q_ref[0]                                      # (TB, Dp)
    cos_a = q_ref[1]                                      # (TB, Dp)
    pt = tail_ref[0]                                      # (Dp, TN)
    phase_score = jnp.zeros((tb, tn), jnp.float32)
    for c in range(n_chunks):                             # static trip count
        lo = c * d_chunk
        hi = lo + d_chunk
        ptc = pt[lo:hi, :]                                # (dc, TN)
        sp = jnp.sin(0.5 * ptc)
        cp = jnp.cos(0.5 * ptc)
        diff = (sin_a[:, lo:hi][:, :, None] * cp[None, :, :]
                - cos_a[:, lo:hi][:, :, None] * sp[None, :, :])   # (TB, dc, TN)
        phase_score = phase_score + jnp.sum(jnp.abs(diff), axis=1)

    x = gamma - (phase_score * phase_w + r_score * mod_w)
    # sigmoid(x) = 1/(1+exp(-x)); approx reciprocal runs on the EUP (~free slot).
    o_ref[...] = pl.reciprocal(1.0 + jnp.exp(-x), approx=True)


def pack_hake_tails(emb_e, embedding_range):
    """Build the (2, D_pad, N) tail pack once (emb_e is fixed in eval) and reuse."""
    N, two_d = emb_e.shape
    D = two_d // 2
    D_pad, _ = _phase_chunking(D)
    scale = embedding_range / math.pi
    pt = (emb_e[:, :D] / scale).astype(jnp.float32)       # (N, D)
    mt = emb_e[:, D:].astype(jnp.float32)                 # (N, D)
    tails = jnp.stack([pt.T, mt.T], axis=0)               # (2, D, N): N on lanes
    if D_pad != D:
        tails = jnp.pad(tails, ((0, 0), (0, D_pad - D), (0, 0)))
    return tails


def hake_score(emb_e, emb_rel, e1, rel_idx, *,
               gamma, phase_weight, modulus_weight, embedding_range,
               tails_packed=None, tile_n=None, tile_b=None):
    """HAKE forward (eval mode): returns sigmoid scores of shape (B, num_ents)."""
    B = e1.shape[0]
    N, two_d = emb_e.shape
    D = two_d // 2
    D_pad, d_chunk = _phase_chunking(D)

    # ---- tail pack (cache with pack_hake_tails to avoid per-call transpose) ----
    if tails_packed is None:
        tails_packed = pack_hake_tails(emb_e, embedding_range)

    # ---- query-side glue (gather, chunk, clamp, precompute) --------------------
    head = emb_e[e1].astype(jnp.float32)                  # (B, 2D)
    r = emb_rel[rel_idx].astype(jnp.float32)              # (B, 3D)
    phase_head, mod_head = head[:, :D], head[:, D:]
    phase_rel, mod_rel, bias_rel = r[:, :D], r[:, D:2 * D], r[:, 2 * D:]

    scale = embedding_range / math.pi
    a = (phase_head + phase_rel) / scale                  # (B, D)
    mod_rel = jnp.abs(mod_rel)
    bias_rel = jnp.minimum(bias_rel, 1.0)                 # clamp(max=1)
    bias_rel = jnp.where(bias_rel < -mod_rel, -mod_rel, bias_rel)
    hm = mod_head * (mod_rel + bias_rel)                  # (B, D)
    omb = 1.0 - bias_rel                                  # (B, D)

    qpack = jnp.stack([jnp.sin(0.5 * a), jnp.cos(0.5 * a),
                       -2.0 * hm * omb, omb * omb, hm * hm],
                      axis=0).astype(jnp.float32)         # (5, B, D)
    if D_pad != D:
        qpack = jnp.pad(qpack, ((0, 0), (0, 0), (0, D_pad - D)))

    # ---- tiling: B axis -----------------------------------------------------
    if tile_b is None:
        tile_b = min(128, _round_up(B, 8))
    tile_b = max(8, _round_up(int(tile_b), 8))
    B_pad = _round_up(B, tile_b)
    if B_pad != B:
        qpack = jnp.pad(qpack, ((0, 0), (0, B_pad - B), (0, 0)))

    # ---- tiling: N axis (generation-aware VMEM budget) -----------------------
    vmem_cap = _vmem_capacity_bytes()
    if vmem_cap <= 64 * 1024 * 1024:       # v7x-class (64 MiB physical)
        budget = 40 * 1024 * 1024
        tn_start = 1024
    else:                                  # v5e / v6e (128 MiB physical)
        budget = 96 * 1024 * 1024
        tn_start = 2048

    N128 = _round_up(N, 128)
    # keep >=2 N-steps when possible so the "parallel" axis shards across 2 TCs
    cap_n = max(128, (N128 // 2) // 128 * 128) if N128 >= 256 else N128

    if tile_n is None:
        tile_n = tn_start
    tile_n = max(128, _round_up(int(tile_n), 128))
    tile_n = min(tile_n, cap_n)

    while True:
        while tile_n > 128 and _vmem_est(tile_b, D_pad, d_chunk, tile_n) > budget:
            tile_n -= 128
        if (_vmem_est(tile_b, D_pad, d_chunk, tile_n) <= budget
                or d_chunk <= 8 or D_pad % (d_chunk // 2) != 0):
            break
        d_chunk //= 2                      # shrink the phase chunk if still over

    N_pad = _round_up(N, tile_n)
    tails = tails_packed
    if N_pad != N:
        tails = jnp.pad(tails, ((0, 0), (0, 0), (0, N_pad - N)))

    n_chunks = D_pad // d_chunk
    grid = (B_pad // tile_b, N_pad // tile_n)

    kernel = functools.partial(
        _hake_kernel,
        gamma=float(gamma),
        phase_w=float(phase_weight),
        mod_w=float(modulus_weight),
        d_chunk=int(d_chunk),
        n_chunks=int(n_chunks),
    )

    scores = pl.pallas_call(
        kernel,
        out_shape=jax.ShapeDtypeStruct((B_pad, N_pad), jnp.float32),
        grid_spec=pltpu.PrefetchScalarGridSpec(
            num_scalar_prefetch=0,
            grid=grid,
            in_specs=[
                # TODO(synk): pipeline_mode=pl.Buffered(1) for the query pack
                # (constant per B-tile) would save one VMEM buffer on v7x.
                pl.BlockSpec((5, tile_b, D_pad), lambda bi, nj: (0, bi, 0)),
                pl.BlockSpec((2, D_pad, tile_n), lambda bi, nj: (0, 0, nj)),
            ],
            out_specs=pl.BlockSpec((tile_b, tile_n), lambda bi, nj: (bi, nj)),
        ),
        compiler_params=pltpu.CompilerParams(
            dimension_semantics=("parallel", "parallel"),
            vmem_limit_bytes=int(budget)),
    )(qpack, tails)

    return scores[:B, :N]


def _reference(emb_e, emb_rel, e1, rel_idx, *,
               gamma, phase_weight, modulus_weight, embedding_range):
    """Pure-JAX reference mirroring the PyTorch forward (eval branch)."""
    D = emb_e.shape[1] // 2
    head = emb_e[e1]
    r = emb_rel[rel_idx]
    phase_head, mod_head = head[:, :D], head[:, D:]
    phase_rel, mod_rel, bias_rel = r[:, :D], r[:, D:2 * D], r[:, 2 * D:]
    phase_tail, mod_tail = emb_e[:, :D], emb_e[:, D:]

    scale = embedding_range / math.pi
    phase_head = phase_head / scale
    phase_rel = phase_rel / scale
    phase_tail = phase_tail / scale

    phase_score = (phase_head + phase_rel)[:, None, :] - phase_tail[None]
    mod_rel = jnp.abs(mod_rel)
    bias_rel = jnp.minimum(bias_rel, 1.0)
    bias_rel = jnp.where(bias_rel < -mod_rel, -mod_rel, bias_rel)

    r_score = (mod_head * (mod_rel + bias_rel))[:, None, :] \
        - mod_tail[None] * (1.0 - bias_rel)[:, None, :]

    phase_score = jnp.sum(jnp.abs(jnp.sin(phase_score / 2)), axis=-1) * phase_weight
    r_score = jnp.sqrt(jnp.sum(r_score * r_score, axis=-1)) * modulus_weight
    return jax.nn.sigmoid(gamma - (phase_score + r_score))


def _xavier_normal(key, shape):
    fan_in, fan_out = shape[1], shape[0]
    std = math.sqrt(2.0 / (fan_in + fan_out))
    return jax.random.normal(key, shape, dtype=jnp.float32) * std


if __name__ == "__main__":
    # Hyper-params (stand-ins for self.p.*) — small demo shapes.
    num_ents = 256
    num_rels = 16
    init_dim = 32          # D
    gamma = 12.0
    epsilon = 2.0
    phase_weight_cfg = 0.5
    modulus_weight_cfg = 1.0
    batch = 8
    # TODO(synk): nn.Dropout(input_drop) is defined but unused in forward; skipped.
    # TODO(synk): BCELoss / training branch not implemented (eval-mode scores only).

    embedding_range = (gamma + epsilon) / init_dim
    phase_weight = phase_weight_cfg * embedding_range      # (1,1) scalar param
    modulus_weight = modulus_weight_cfg                    # (1,1) scalar param

    key = jax.random.PRNGKey(0)
    k_e, k_r, k_e1, k_rel = jax.random.split(key, 4)
    emb_e = _xavier_normal(k_e, (num_ents, init_dim * 2))
    emb_rel = _xavier_normal(k_r, (num_rels, init_dim * 3))
    e1 = jax.random.randint(k_e1, (batch,), 0, num_ents, dtype=jnp.int32)
    rel_idx = jax.random.randint(k_rel, (batch,), 0, num_rels, dtype=jnp.int32)

    # Tail pack is a function of emb_e only: build once, reuse for every call.
    tails_packed = jax.block_until_ready(pack_hake_tails(emb_e, embedding_range))

    score = hake_score(
        emb_e, emb_rel, e1, rel_idx,
        gamma=gamma, phase_weight=phase_weight,
        modulus_weight=modulus_weight, embedding_range=embedding_range,
        tails_packed=tails_packed)
    score = jax.block_until_ready(score)

    ref = _reference(
        emb_e, emb_rel, e1, rel_idx,
        gamma=gamma, phase_weight=phase_weight,
        modulus_weight=modulus_weight, embedding_range=embedding_range)
    ref = jax.block_until_ready(ref)

    assert score.shape == (batch, num_ents)
    # tolerance covers the approx EUP reciprocal (~1e-4 rel) and the expanded
    # quadratic form of the modulus norm.
    assert jnp.max(jnp.abs(score - ref)) < 1e-3

    print("KERNEL_OK")
</pallas_src>

<mosaic_0001>
module attributes {stable_mosaic.version = 11 : i64} {
  func.func @_hake_kernel(%arg0: i32, %arg1: i32, %arg2: memref<5x8x32xf32, #tpu.memory_space<vmem>>, %arg3: memref<2x32x128xf32, #tpu.memory_space<vmem>>, %arg4: memref<8x128xf32, #tpu.memory_space<vmem>>) attributes {dimension_semantics = [#tpu.dimension_semantics<parallel>, #tpu.dimension_semantics<parallel>], iteration_bounds = array<i64: 1, 2>, scalar_prefetch = 0 : i64, scratch_operands = 0 : i64, tpu.core_type = #tpu.core_type<tc>, window_params = [{transform_indices = @transform_0, window_bounds = array<i64: 5, 8, 32>}, {transform_indices = @transform_1, window_bounds = array<i64: 2, 32, 128>}, {transform_indices = @transform_2, window_bounds = array<i64: 8, 128>}]} {
    %c1 = arith.constant 1 : index
    %c0 = arith.constant 0 : index
    %c0_0 = arith.constant 0 : index
    %0 = vector.load %arg3[%c1, %c0, %c0_0] : memref<2x32x128xf32, #tpu.memory_space<vmem>>, vector<1x32x128xf32>
    %1 = vector.shape_cast %0 : vector<1x32x128xf32> to vector<32x128xf32>
    %c4 = arith.constant 4 : index
    %c0_1 = arith.constant 0 : index
    %c0_2 = arith.constant 0 : index
    %2 = vector.load %arg2[%c4, %c0_1, %c0_2] : memref<5x8x32xf32, #tpu.memory_space<vmem>>, vector<1x8x32xf32>
    %3 = vector.shape_cast %2 : vector<1x8x32xf32> to vector<8x32xf32>
    %cst = arith.constant dense<0.000000e+00> : vector<8xf32>
    %4 = vector.multi_reduction <add>, %3, %cst [1] : vector<8x32xf32> to vector<8xf32>
    %5 = vector.shape_cast %4 : vector<8xf32> to vector<8x1xf32>
    %c2 = arith.constant 2 : index
    %c0_3 = arith.constant 0 : index
    %c0_4 = arith.constant 0 : index
    %6 = vector.load %arg2[%c2, %c0_3, %c0_4] : memref<5x8x32xf32, #tpu.memory_space<vmem>>, vector<1x8x32xf32>
    %7 = vector.shape_cast %6 : vector<1x8x32xf32> to vector<8x32xf32>
    %cst_5 = arith.constant dense<0.000000e+00> : vector<8x128xf32>
    %8 = tpu.matmul %7, %1, %cst_5 {dimension_numbers = #tpu.dot_dimension_numbers<[1], [0], [0], [1], [0, 0, 1, 1], [], []>} : vector<8x32xf32>, vector<32x128xf32>, vector<8x128xf32> -> vector<8x128xf32>
    %9 = vector.broadcast %5 : vector<8x1xf32> to vector<8x128xf32>
    %10 = arith.addf %9, %8 : vector<8x128xf32>
    %c3 = arith.constant 3 : index
    %c0_6 = arith.constant 0 : index
    %c0_7 = arith.constant 0 : index
    %11 = vector.load %arg2[%c3, %c0_6, %c0_7] : memref<5x8x32xf32, #tpu.memory_space<vmem>>, vector<1x8x32xf32>
    %12 = vector.shape_cast %11 : vector<1x8x32xf32> to vector<8x32xf32>
    %13 = arith.mulf %1, %1 : vector<32x128xf32>
    %cst_8 = arith.constant dense<0.000000e+00> : vector<8x128xf32>
    %14 = tpu.matmul %12, %13, %cst_8 {dimension_numbers = #tpu.dot_dimension_numbers<[1], [0], [0], [1], [0, 0, 1, 1], [], []>} : vector<8x32xf32>, vector<32x128xf32>, vector<8x128xf32> -> vector<8x128xf32>
    %15 = arith.addf %10, %14 : vector<8x128xf32>
    %cst_9 = arith.constant 0.000000e+00 : f32
    %16 = vector.broadcast %cst_9 : f32 to vector<8x128xf32>
    %17 = arith.maximumf %15, %16 : vector<8x128xf32>
    %18 = math.sqrt %17 : vector<8x128xf32>
    %c0_10 = arith.constant 0 : index
    %c0_11 = arith.constant 0 : index
    %c0_12 = arith.constant 0 : index
    %19 = vector.load %arg2[%c0_10, %c0_11, %c0_12] : memref<5x8x32xf32, #tpu.memory_space<vmem>>, vector<1x8x32xf32>
    %20 = vector.shape_cast %19 : vector<1x8x32xf32> to vector<8x32xf32>
    %c1_13 = arith.constant 1 : index
    %c0_14 = arith.constant 0 : index
    %c0_15 = arith.constant 0 : index
    %21 = vector.load %arg2[%c1_13, %c0_14, %c0_15] : memref<5x8x32xf32, #tpu.memory_space<vmem>>, vector<1x8x32xf32>
    %22 = vector.shape_cast %21 : vector<1x8x32xf32> to vector<8x32xf32>
    %c0_16 = arith.constant 0 : index
    %c0_17 = arith.constant 0 : index
    %c0_18 = arith.constant 0 : index
    %23 = vector.load %arg3[%c0_16, %c0_17, %c0_18] : memref<2x32x128xf32, #tpu.memory_space<vmem>>, vector<1x32x128xf32>
    %24 = vector.shape_cast %23 : vector<1x32x128xf32> to vector<32x128xf32>
    %cst_19 = arith.constant 0.000000e+00 : f32
    %25 = vector.broadcast %cst_19 : f32 to vector<8x128xf32>
    %cst_20 = arith.constant 5.000000e-01 : f32
    %26 = vector.broadcast %cst_20 : f32 to vector<32x128xf32>
    %27 = arith.mulf %26, %24 : vector<32x128xf32>
    %28 = math.sin %27 : vector<32x128xf32>
    %cst_21 = arith.constant 5.000000e-01 : f32
    %29 = vector.broadcast %cst_21 : f32 to vector<32x128xf32>
    %30 = arith.mulf %29, %24 : vector<32x128xf32>
    %31 = math.cos %30 : vector<32x128xf32>
    %32 = vector.shape_cast %20 : vector<8x32xf32> to vector<8x32x1xf32>
    %33 = vector.shape_cast %31 : vector<32x128xf32> to vector<1x32x128xf32>
    %34 = vector.broadcast %32 : vector<8x32x1xf32> to vector<8x32x128xf32>
    %35 = vector.broadcast %33 : vector<1x32x128xf32> to vector<8x32x128xf32>
    %36 = arith.mulf %34, %35 : vector<8x32x128xf32>
    %37 = vector.shape_cast %22 : vector<8x32xf32> to vector<8x32x1xf32>
    %38 = vector.shape_cast %28 : vector<32x128xf32> to vector<1x32x128xf32>
    %39 = vector.broadcast %37 : vector<8x32x1xf32> to vector<8x32x128xf32>
    %40 = vector.broadcast %38 : vector<1x32x128xf32> to vector<8x32x128xf32>
    %41 = arith.mulf %39, %40 : vector<8x32x128xf32>
    %42 = arith.subf %36, %41 : vector<8x32x128xf32>
    %43 = math.absf %42 : vector<8x32x128xf32>
    %cst_22 = arith.constant dense<0.000000e+00> : vector<8x128xf32>
    %44 = vector.multi_reduction <add>, %43, %cst_22 [1] : vector<8x32x128xf32> to vector<8x128xf32>
    %45 = arith.addf %25, %44 : vector<8x128xf32>
    %cst_23 = arith.constant 2.187500e-01 : f32
    %46 = vector.broadcast %cst_23 : f32 to vector<8x128xf32>
    %47 = arith.mulf %45, %46 : vector<8x128xf32>
    %cst_24 = arith.constant 1.000000e+00 : f32
    %48 = vector.broadcast %cst_24 : f32 to vector<8x128xf32>
    %49 = arith.mulf %18, %48 : vector<8x128xf32>
    %50 = arith.addf %47, %49 : vector<8x128xf32>
    %cst_25 = arith.constant 1.200000e+01 : f32
    %51 = vector.broadcast %cst_25 : f32 to vector<8x128xf32>
    %52 = arith.subf %51, %50 : vector<8x128xf32>
    %cst_26 = arith.constant 0.000000e+00 : f32
    %53 = vector.broadcast %cst_26 : f32 to vector<8x128xf32>
    %54 = arith.subf %53, %52 : vector<8x128xf32>
    %55 = math.exp %54 : vector<8x128xf32>
    %cst_27 = arith.constant 1.000000e+00 : f32
    %56 = vector.broadcast %cst_27 : f32 to vector<8x128xf32>
    %57 = arith.addf %56, %55 : vector<8x128xf32>
    %58 = tpu.reciprocal %57 {approx = true} : vector<8x128xf32> -> vector<8x128xf32>
    %c0_28 = arith.constant 0 : index
    %c0_29 = arith.constant 0 : index
    %59 = vector.load %arg4[%c0_28, %c0_29] : memref<8x128xf32, #tpu.memory_space<vmem>>, vector<8x128xf32>
    tpu.vector_store %arg4[%c0_28, %c0_29], %58 {strides = array<i32>} : memref<8x128xf32, #tpu.memory_space<vmem>>, vector<8x128xf32>,
    return
  }
  func.func @transform_0(%arg0: i32, %arg1: i32) -> (i32, i32, i32) {
    %c0_i32 = arith.constant 0 : i32
    %c0_i32_0 = arith.constant 0 : i32
    %c0_i32_1 = arith.constant 0 : i32
    return %c0_i32, %arg0, %c0_i32_0 : i32, i32, i32
  }
  func.func @transform_1(%arg0: i32, %arg1: i32) -> (i32, i32, i32) {
    %c0_i32 = arith.constant 0 : i32
    %c0_i32_0 = arith.constant 0 : i32
    %c0_i32_1 = arith.constant 0 : i32
    return %c0_i32, %c0_i32_0, %arg1 : i32, i32, i32
  }
  func.func @transform_2(%arg0: i32, %arg1: i32) -> (i32, i32) {
    %c0_i32 = arith.constant 0 : i32
    return %arg0, %arg1 : i32, i32
  }
}

</mosaic_0001>

<llo_original>
// kernel: tpu_custom_call.1
$region0: #{tpu_custom_call.1}
  #allocation0 [shape = 'u32[]', space=smem, size = 0x4, offset = 0x4, fixed_abs, tag = 'smem constant byte address 0x4 - core index']
  #allocation1 [shape = 'u32[144,128]{1,0:T(1,128)}', space=vmem, size = 0x12000, scoped, tag = 'internal scratch']
  %s0 = inlined_call_operand.hbm [shape: f32[5,8,32], index: 0, kind: input, shape index: {}]
  %s1 = inlined_call_operand.hbm [shape: f32[2,32,256], index: 1, kind: input, shape index: {}]
  %s2 = inlined_call_operand.hbm [shape: f32[8,256], index: 2, kind: output, shape index: {}]
  %s3 = sld [smem:[#allocation0]]
  $region49: #{tpu_custom_call.1} parent=0
    _
  %s5 = ssub.s32 1, %s3
  %s6 = scalar_select 0, %s5, %s3
  $region1: #{tpu_custom_call.1} parent=0
    #allocation2 [shape = 'u8[20480]{0}', space=vmem, size = 0x5000, scoped, tag = 'input window, operand 0, single buffered']
    #allocation3 [shape = 's32[2]{0}', space=sflag, size = 0x8, scoped, tag = 'scoped memory for tpu_custom_call.1']
    #allocation4 [shape = 's32[2]{0}', space=sflag, size = 0x8, scoped, tag = 'scoped memory for tpu_custom_call.1']
    #allocation5 [shape = 'u8[65536]{0}', space=vmem, size = 0x10000, scoped, tag = 'input window, operand 1']
    #allocation6 [shape = 's32[2]{0}', space=sflag, size = 0x8, scoped, tag = 'scoped memory for tpu_custom_call.1']
    #allocation7 [shape = 'u8[8192]{0}', space=vmem, size = 0x2000, scoped, tag = 'output window, operand 0']
    %7 = vsyncpa [#allocation3], 0
    %8 = vsyncpa [#allocation6], 0
    %s9 = scalar_lea.sflag [#allocation6], 1
    %10 = vsyncpa %s9, 0
    %11 = vsyncpa [#allocation4], 0
    %s12 = scalar_lea.sflag [#allocation4], 1
    %13 = vsyncpa %s12, 0
    loop: start=0, step=1, limit=4
    $region2: #{tpu_custom_call.1} parent=1 // loop_pre_header
      _
    $region3: #{tpu_custom_call.1} parent=1 // loop_header
      %s15 = sphi 0, %s19
      %p16 = scmp.ge.s32.totalorder %s15, 4
      %s22 = sphi 0, %s34
      %s23 = sphi 0, %s30
      %s24 = sphi 0, %s22
      %s25 = sphi 0, %s23
      %s26 = sphi 0, %s24
      %s27 = sphi 0, %s25
      %s37 = sphi 0, %s39
      %s40 = sphi 0, %s37
      %s41 = sphi 0, %s40
      %s57 = sphi 0, %s41
      %s63 = sphi 0, %s65
      %s66 = sphi 0, %s63
      %s67 = sphi 0, %s66
      %s83 = sphi 0, %s67
      %s91 = sphi 0, %s93
      %s94 = sphi 0, %s91
      %s95 = sphi 0, %s94
      %s111 = sphi 0, %s95
    $region4: #{tpu_custom_call.1} parent=1 // loop_header_branch
      %18 = sbr.rel (%p16) target = $region8
    $region5: #{tpu_custom_call.1} parent=1 // loop_body
      %s20 = ssub.s32 %s15, 1
      %s21 = ssub.s32 %s15, 2
      %s28 = sadd.s32 1, %s23
      %p29 = scmp.ge.s32.totalorder %s28, 2
      %s30 = scalar_select %p29, 0, %s28
      %s31 = sadd.s32 1, %s22
      %s32 = scalar_select %p29, %s31, %s22
      %p33 = scmp.ge.s32.totalorder %s32, 1
      %s34 = scalar_select %p33, 0, %s32
      %s35 = ssub.s32 %s22, %s34
      %p36 = scmp.eq.s32.totalorder %s35, 0
      %s38 = sadd.s32 %s37, 1
      %s39 = scalar_select %p36, %s37, %s38
      %p42 = pneg %p36
      %p43 = scmp.eq.s32.totalorder %s15, 1
      %p44 = por %p42, %p43
      %p45 = scmp.ne.s32.totalorder %s37, %s40
      %p46 = scmp.eq.s32.totalorder %s15, 0
      %p47 = por %p45, %p46
      %p48 = scmp.ne.s32.totalorder %s37, %s40
      %p49 = scmp.eq.s32.totalorder %s20, 1
      %p50 = por %p48, %p49
      %p51 = scmp.ne.s32.totalorder %s40, %s41
      %p52 = scmp.eq.s32.totalorder %s20, 0
      %p53 = por %p51, %p52
      %p54 = scmp.ne.s32.totalorder %s40, %s41
      %p55 = scmp.eq.s32.totalorder %s21, 1
      %p56 = por %p54, %p55
      %p58 = scmp.ne.s32.totalorder %s41, %s57
      %p59 = scmp.eq.s32.totalorder %s21, 0
      %p60 = por %p58, %p59
      %s61 = ssub.s32 %s23, %s30
      %p62 = scmp.eq.s32.totalorder %s61, 0
      %s64 = sadd.s32 %s63, 1
      %s65 = scalar_select %p62, %s63, %s64
      %p68 = pneg %p62
      %p69 = scmp.eq.s32.totalorder %s15, 1
      %p70 = por %p68, %p69
      %p71 = scmp.ne.s32.totalorder %s63, %s66
      %p72 = scmp.eq.s32.totalorder %s15, 0
      %p73 = por %p71, %p72
      %p74 = scmp.ne.s32.totalorder %s63, %s66
      %p75 = scmp.eq.s32.totalorder %s20, 1
      %p76 = por %p74, %p75
      %p77 = scmp.ne.s32.totalorder %s66, %s67
      %p78 = scmp.eq.s32.totalorder %s20, 0
      %p79 = por %p77, %p78
      %p80 = scmp.ne.s32.totalorder %s66, %s67
      %p81 = scmp.eq.s32.totalorder %s21, 1
      %p82 = por %p80, %p81
      %p84 = scmp.ne.s32.totalorder %s67, %s83
      %p85 = scmp.eq.s32.totalorder %s21, 0
      %p86 = por %p84, %p85
      %s87 = ssub.s32 %s22, %s34
      %s88 = ssub.s32 %s23, %s30
      %s89 = sor.u32 %s87, %s88
      %p90 = scmp.eq.s32.totalorder %s89, 0
      %s92 = sadd.s32 %s91, 1
      %s93 = scalar_select %p90, %s91, %s92
      %p96 = pneg %p90
      %p97 = scmp.eq.s32.totalorder %s15, 1
      %p98 = por %p96, %p97
      %p99 = scmp.ne.s32.totalorder %s91, %s94
      %p100 = scmp.eq.s32.totalorder %s15, 0
      %p101 = por %p99, %p100
      %p102 = scmp.ne.s32.totalorder %s91, %s94
      %p103 = scmp.eq.s32.totalorder %s20, 1
      %p104 = por %p102, %p103
      %p105 = scmp.ne.s32.totalorder %s94, %s95
      %p106 = scmp.eq.s32.totalorder %s20, 0
      %p107 = por %p105, %p106
      %p108 = scmp.ne.s32.totalorder %s94, %s95
      %p109 = scmp.eq.s32.totalorder %s21, 1
      %p110 = por %p108, %p109
      %p112 = scmp.ne.s32.totalorder %s95, %s111
      %p113 = scmp.eq.s32.totalorder %s21, 0
      %p114 = por %p112, %p113
      %p115 = scmp.le.s32.totalorder 1, %s15
      %p116 = scmp.lt.s32.totalorder %s15, 3
      %p117 = pnand %p115, %p116
      %p118 = pneg %p117
      // Predicated region
      $region9: #{tpu_custom_call.1} parent=5 // pred_check
        _
      $region10: #{tpu_custom_call.1} parent=5 // pred_check_branch
        %120 = sbr.rel (%p117) target = $region12
      $region11: #{tpu_custom_call.1} parent=5 // pred_region
        %s121 = ssub.s32 %s15, 1
        // Predicated region
        $region13: #{tpu_custom_call.1} parent=11 // pred_check
          %p122 = pneg %p53
        $region14: #{tpu_custom_call.1} parent=11 // pred_check_branch
          %124 = sbr.rel (%p122) target = $region16
        $region15: #{tpu_custom_call.1} parent=11 // pred_region
          %s126 = ssub.s32 640, 640
          %127 = vsyncadd [#allocation3], %s126
          %s128 = smul.addr %s24, 128
          %s129 = scalar_lea.hbm %s0, %s128
          %s130 = sshll.u32 [#allocation2], 4
          %s131 = int_to_ptr.vmem [resolvable:$true] %s130
          %136 = dma.hbm_to_vmem [thread:$0]  %s129, 640, %s131, [#allocation3], 128, 128, 8
        $region16: #{tpu_custom_call.1} parent=11 // pred_fallthru
          _
      $region12: #{tpu_custom_call.1} parent=5 // pred_fallthru
        _
      %p137 = scmp.lt.s32.totalorder %s15, 2
      // Predicated region
      $region17: #{tpu_custom_call.1} parent=5 // pred_check
        %p138 = pneg %p137
      $region18: #{tpu_custom_call.1} parent=5 // pred_check_branch
        %140 = sbr.rel (%p138) target = $region20
      $region19: #{tpu_custom_call.1} parent=5 // pred_region
        // Predicated region
        $region21: #{tpu_custom_call.1} parent=19 // pred_check
          %p141 = pneg %p73
        $region22: #{tpu_custom_call.1} parent=19 // pred_check_branch
          %143 = sbr.rel (%p141) target = $region24
        $region23: #{tpu_custom_call.1} parent=19 // pred_region
          %s144 = sand.u32 %s63, 1
          %s145 = scalar_lea.sflag [#allocation6], %s144
          %s146 = sand.u32 %s63, 1
          %s147 = smul.addr %s146, 64
          %s148 = scalar_lea.vmem [#allocation5], %s147
          %s150 = ssub.s32 1024, 1024
          %151 = vsyncadd %s145, %s150
          %s152 = smul.addr %s23, 128
          %s153 = scalar_lea.hbm %s1, %s152
          %s154 = sshll.u32 %s148, 4
          %s155 = int_to_ptr.vmem [resolvable:$true] %s154
          %160 = dma.hbm_to_vmem [thread:$0]  %s153, 1024, %s155, %s145, 256, 128, 8
        $region24: #{tpu_custom_call.1} parent=19 // pred_fallthru
          _
      $region20: #{tpu_custom_call.1} parent=5 // pred_fallthru
        _
      %p161 = scmp.le.s32.totalorder 1, %s15
      %p162 = scmp.lt.s32.totalorder %s15, 3
      %p163 = pnand %p161, %p162
      %p164 = pneg %p163
      // Predicated region
      $region25: #{tpu_custom_call.1} parent=5 // pred_check
        _
      $region26: #{tpu_custom_call.1} parent=5 // pred_check_branch
        %166 = sbr.rel (%p163) target = $region28
      $region27: #{tpu_custom_call.1} parent=5 // pred_region
        %s167 = ssub.s32 %s15, 1
        // Predicated region
        $region29: #{tpu_custom_call.1} parent=27 // pred_check
          %p168 = pneg %p53
        $region30: #{tpu_custom_call.1} parent=27 // pred_check_branch
          %170 = sbr.rel (%p168) target = $region32
        $region31: #{tpu_custom_call.1} parent=27 // pred_region
          %171 = dma.done [#allocation3], 640
        $region32: #{tpu_custom_call.1} parent=27 // pred_fallthru
          _
        %s172 = sand.u32 %s66, 1
        %s173 = scalar_lea.sflag [#allocation6], %s172
        %s174 = sand.u32 %s66, 1
        %s175 = smul.addr %s174, 64
        %s176 = scalar_lea.vmem [#allocation5], %s175
        // Predicated region
        $region33: #{tpu_custom_call.1} parent=27 // pred_check
          %p177 = pneg %p79
        $region34: #{tpu_custom_call.1} parent=27 // pred_check_branch
          %179 = sbr.rel (%p177) target = $region36
        $region35: #{tpu_custom_call.1} parent=27 // pred_region
          %180 = dma.done %s173, 1024
        $region36: #{tpu_custom_call.1} parent=27 // pred_fallthru
          _
        %p181 = pneg %p53
        %p182 = pneg %p50
        %s183 = sand.u32 %s66, 1
        %s184 = scalar_lea.sflag [#allocation6], %s183
        %s185 = sand.u32 %s66, 1
        %s186 = smul.addr %s185, 64
        %s187 = scalar_lea.vmem [#allocation5], %s186
        %p188 = pneg %p79
        %p189 = pneg %p76
        %p190 = pneg %p107
        %p191 = pneg %p104
        %s192 = sand.u32 %s94, 1
        %s193 = scalar_lea.sflag [#allocation4], %s192
        %s194 = sand.u32 %s94, 1
        %s195 = smul.addr %s194, 8
        %s196 = scalar_lea.vmem [#allocation7], %s195
        %s197 = scalar_lea.vmem %s176, 32 [#allocation5]
        %v198 = vld [vmem:[%s197] sm:$0xff]
        %v199 = vld [vmem:[%s197 + $0x8] sm:$0xff]
        %v200 = vld [vmem:[%s197 + $0x10] sm:$0xff]
        %v201 = vld [vmem:[%s197 + $0x18] sm:$0xff]
        %s202 = scalar_lea.vmem [#allocation2], 32
        %v203 = vld [vmem:[%s202] sm:$0xff]
        %vm204 = vcmask 261120
        %v205 = vsel %vm204, %v203, 0.0
        %206 = vadd.xlane.f32.xlu0 %v205
        %v207 = vpop.xlane.xlu0 %206
        %s208 = scalar_lea.vmem [#allocation2], 16
        %v209 = vld [vmem:[%s208] sm:$0xff]
        %v211 = vsel %vm204, %v209, 0
        %213 = vmatprep.subr.mxu0 0.0
        %214 = vmatpush1.msra.mxu0 %v198
        %215 = vmatprep.subr.mxu0 0.0
        %216 = vmatpush1.msra.mxu0 %v199
        %217 = vmatprep.subr.mxu0 0.0
        %218 = vmatpush1.msra.mxu0 %v200
        %219 = vmatprep.subr.mxu0 0.0
        %220 = vmatpush1.msra.mxu0 %v201
        %221 = vmatprep.subr.mxu0 0.0
        %222 = vmatpush1.msra.mxu0 0.0
        %223 = vmatprep.subr.mxu0 0.0
        %224 = vmatpush1.msra.mxu0 0.0
        %225 = vmatprep.subr.mxu0 0.0
        %226 = vmatpush1.msra.mxu0 0.0
        %227 = vmatprep.subr.mxu0 0.0
        %228 = vmatpush1.msra.mxu0 0.0
        %229 = vmatprep.subr.mxu0 0.0
        %230 = vmatpush1.msra.mxu0 0.0
        %231 = vmatprep.subr.mxu0 0.0
        %232 = vmatpush1.msra.mxu0 0.0
        %233 = vmatprep.subr.mxu0 0.0
        %234 = vmatpush1.msra.mxu0 0.0
        %235 = vmatprep.subr.mxu0 0.0
        %236 = vmatpush1.msra.mxu0 0.0
        %237 = vmatprep.subr.mxu0 0.0
        %238 = vmatpush1.msra.mxu0 0.0
        %239 = vmatprep.subr.mxu0 0.0
        %240 = vmatpush1.msra.mxu0 0.0
        %241 = vmatprep.subr.mxu0 0.0
        %242 = vmatpush1.msra.mxu0 0.0
        %243 = vmatprep.subr.mxu0 0.0
        %244 = vmatpush1.msra.mxu0 0.0
        %245 = vmatprep.subr.mxu0 0.0
        %246 = vmatpush1.msra.mxu0 0.0
        %247 = vmatprep.subr.mxu0 0.0
        %248 = vmatpush1.msra.mxu0 0.0
        %249 = vmatprep.subr.mxu0 0.0
        %250 = vmatpush1.msra.mxu0 0.0
        %251 = vmatprep.subr.mxu0 0.0
        %252 = vmatpush1.msra.mxu0 0.0
        %253 = vmatprep.subr.mxu0 0.0
        %254 = vmatpush1.msra.mxu0 0.0
        %255 = vmatprep.subr.mxu0 0.0
        %256 = vmatpush1.msra.mxu0 0.0
        %257 = vmatprep.subr.mxu0 0.0
        %258 = vmatpush1.msra.mxu0 0.0
        %259 = vmatprep.subr.mxu0 0.0
        %260 = vmatpush1.msra.mxu0 0.0
        %261 = vmatprep.subr.mxu0 0.0
        %262 = vmatpush1.msra.mxu0 0.0
        %263 = vmatprep.subr.mxu0 0.0
        %264 = vmatpush1.msra.mxu0 0.0
        %265 = vmatprep.subr.mxu0 0.0
        %266 = vmatpush1.msra.mxu0 0.0
        %267 = vmatprep.subr.mxu0 0.0
        %268 = vmatpush1.msra.mxu0 0.0
        %269 = vmatprep.subr.mxu0 0.0
        %270 = vmatpush1.msra.mxu0 0.0
        %271 = vmatprep.subr.mxu0 0.0
        %272 = vmatpush1.msra.mxu0 0.0
        %273 = vmatprep.subr.mxu0 0.0
        %274 = vmatpush1.msra.mxu0 0.0
        %275 = vmatprep.subr.mxu0 0.0
        %276 = vmatpush1.msra.mxu0 0.0
        %277 = vmatprep.mubr.f32.mxu0 0.0
        %278 = vmatmul.mubr.f32.gmra.mrb[0].mxu0 %v211
        %v279 = vpop.f32.mrb[0].mxu0
        %v280 = vadd.f32 0.0, %v279
        %v281 = vpop.f32.mrb[0].mxu0
        %282 = vdwg.mxu0
        %v283 = vadd.f32 %v207, %v280
        %s284 = scalar_lea.vmem [#allocation2], 24
        %v285 = vld [vmem:[%s284] sm:$0xff]
        %v286 = vmul.f32 %v198, %v198
        %v287 = vmul.f32 %v199, %v199
        %v288 = vmul.f32 %v200, %v200
        %v289 = vmul.f32 %v201, %v201
        %v291 = vsel %vm204, %v285, 0
        %293 = vmatprep.subr.mxu0 0.0
        %294 = vmatpush1.msra.mxu0 %v286
        %295 = vmatprep.subr.mxu0 0.0
        %296 = vmatpush1.msra.mxu0 %v287
        %297 = vmatprep.subr.mxu0 0.0
        %298 = vmatpush1.msra.mxu0 %v288
        %299 = vmatprep.subr.mxu0 0.0
        %300 = vmatpush1.msra.mxu0 %v289
        %301 = vmatprep.subr.mxu0 0.0
        %302 = vmatpush1.msra.mxu0 0.0
        %303 = vmatprep.subr.mxu0 0.0
        %304 = vmatpush1.msra.mxu0 0.0
        %305 = vmatprep.subr.mxu0 0.0
        %306 = vmatpush1.msra.mxu0 0.0
        %307 = vmatprep.subr.mxu0 0.0
        %308 = vmatpush1.msra.mxu0 0.0
        %309 = vmatprep.subr.mxu0 0.0
        %310 = vmatpush1.msra.mxu0 0.0
        %311 = vmatprep.subr.mxu0 0.0
        %312 = vmatpush1.msra.mxu0 0.0
        %313 = vmatprep.subr.mxu0 0.0
        %314 = vmatpush1.msra.mxu0 0.0
        %315 = vmatprep.subr.mxu0 0.0
        %316 = vmatpush1.msra.mxu0 0.0
        %317 = vmatprep.subr.mxu0 0.0
        %318 = vmatpush1.msra.mxu0 0.0
        %319 = vmatprep.subr.mxu0 0.0
        %320 = vmatpush1.msra.mxu0 0.0
        %321 = vmatprep.subr.mxu0 0.0
        %322 = vmatpush1.msra.mxu0 0.0
        %323 = vmatprep.subr.mxu0 0.0
        %324 = vmatpush1.msra.mxu0 0.0
        %325 = vmatprep.subr.mxu0 0.0
        %326 = vmatpush1.msra.mxu0 0.0
        %327 = vmatprep.subr.mxu0 0.0
        %328 = vmatpush1.msra.mxu0 0.0
        %329 = vmatprep.subr.mxu0 0.0
        %330 = vmatpush1.msra.mxu0 0.0
        %331 = vmatprep.subr.mxu0 0.0
        %332 = vmatpush1.msra.mxu0 0.0
        %333 = vmatprep.subr.mxu0 0.0
        %334 = vmatpush1.msra.mxu0 0.0
        %335 = vmatprep.subr.mxu0 0.0
        %336 = vmatpush1.msra.mxu0 0.0
        %337 = vmatprep.subr.mxu0 0.0
        %338 = vmatpush1.msra.mxu0 0.0
        %339 = vmatprep.subr.mxu0 0.0
        %340 = vmatpush1.msra.mxu0 0.0
        %341 = vmatprep.subr.mxu0 0.0
        %342 = vmatpush1.msra.mxu0 0.0
        %343 = vmatprep.subr.mxu0 0.0
        %344 = vmatpush1.msra.mxu0 0.0
        %345 = vmatprep.subr.mxu0 0.0
        %346 = vmatpush1.msra.mxu0 0.0
        %347 = vmatprep.subr.mxu0 0.0
        %348 = vmatpush1.msra.mxu0 0.0
        %349 = vmatprep.subr.mxu0 0.0
        %350 = vmatpush1.msra.mxu0 0.0
        %351 = vmatprep.subr.mxu0 0.0
        %352 = vmatpush1.msra.mxu0 0.0
        %353 = vmatprep.subr.mxu0 0.0
        %354 = vmatpush1.msra.mxu0 0.0
        %355 = vmatprep.subr.mxu0 0.0
        %356 = vmatpush1.msra.mxu0 0.0
        %357 = vmatprep.mubr.f32.mxu0 0.0
        %358 = vmatmul.mubr.f32.gmra.mrb[0].mxu0 %v291
        %v359 = vpop.f32.mrb[0].mxu0
        %v360 = vadd.f32 0.0, %v359
        %v361 = vpop.f32.mrb[0].mxu0
        %362 = vdwg.mxu0
        %v363 = vadd.f32 %v283, %v360
        %v364 = vmax.f32 %v363, 0.0
        %v365 = vrsqrt.pop %v364
        %v366 = vmul.f32 %v364, %v365
        %vm367 = vcmp.eq.f32.partialorder %v364, inf
        %v368 = vsel %vm367, %v364, %v366
        %vm369 = vcmp.eq.f32.partialorder %v364, 0.0
        %v370 = vand.u32 %v364, 2147483648
        %v371 = vsel %vm369, %v370, %v368
        %v372 = vld [vmem:[#allocation2] sm:$0xff]
        %s373 = scalar_lea.vmem [#allocation2], 8
        %v374 = vld [vmem:[%s373] sm:$0xff]
        %v375 = vld [vmem:[%s176] sm:$0xff]
        %v376 = vld [vmem:[%s176 + $0x8] sm:$0xff]
        %v377 = vld [vmem:[%s176 + $0x10] sm:$0xff]
        %v378 = vld [vmem:[%s176 + $0x18] sm:$0xff]
        %v379 = vmul.f32 %v375, 0.5
        %v380 = vmul.f32 %v376, 0.5
        %v381 = vmul.f32 %v377, 0.5
        %v382 = vmul.f32 %v378, 0.5
        %v383 = vand.u32 2147483647, %v379
        %vm384 = vcmp.le.f32.partialorder %v383, 0.7853982
        %vm385 = vcmp.lt.s32.totalorder %v379, 0
        %v386 = vand.u32 %v379, 2139095040
        %v387 = vshrl.u32 %v386, 23
        %v388 = vsub.s32 %v387, 127
        %v389 = vand.u32 2147483647, %v379
        %v390 = vand.u32 %v389, 8388607
        %v391 = vor.u32 %v390, 8388608
        %v392 = vsub.s32 0, %v391
        %v393 = vadd.s32 %v388, 1
        %vm394 = vcmp.gt.s32.totalorder %v393, 0
        %v395 = vsel %vm394, %v393, 0
        %v396 = vshrl.u32 %v395, 5
        %v397 = vand.u32 %v395, 31
        %v398 = vsub.s32 32, %v397
        %v399 = vshrl.u32 683565275, %v398
        %v400 = vshll.u32 683565275, %v397
        %v401 = vshrl.u32 2475754826, %v398
        %v402 = vor.u32 %v400, %v401
        %v403 = vshll.u32 2475754826, %v397
        %v404 = vshrl.u32 2131351028, %v398
        %v405 = vor.u32 %v403, %v404
        %v406 = vshll.u32 2131351028, %v397
        %v407 = vshrl.u32 2102212464, %v398
        %v408 = vor.u32 %v406, %v407
        %v409 = vshll.u32 2102212464, %v397
        %v410 = vshrl.u32 920167782, %v398
        %v411 = vor.u32 %v409, %v410
        %v412 = vshll.u32 920167782, %v397
        %v413 = vshrl.u32 1326507024, %v398
        %v414 = vor.u32 %v412, %v413
        %vm415 = vcmp.lt.s32.totalorder %v396, 1
        %vm416 = vcmp.lt.s32.totalorder %v396, 2
        %vm417 = vcmp.lt.s32.totalorder %v396, 3
        %vm418 = vcmp.lt.s32.totalorder %v396, 4
        %v419 = vsel %vm415, %v399, %v402
        %v420 = vsel %vm418, %v408, 2102212464
        %v421 = vsel %vm417, %v405, %v420
        %v422 = vsel %vm416, %v419, %v421
        %v423 = vsel %vm415, %v402, %v405
        %v424 = vsel %vm418, %v411, 920167782
        %v425 = vsel %vm417, %v408, %v424
        %v426 = vsel %vm416, %v423, %v425
        %v427 = vsel %vm415, %v405, %v408
        %v428 = vsel %vm418, %v414, 1326507024
        %v429 = vsel %vm417, %v411, %v428
        %v430 = vsel %vm416, %v427, %v429
        %v431 = vshll.u32 %v391, 8
        %v432 = vmul.u32.u64.compose %v431, %v430
        %v433 = vextract.low.u32 %v432
        %v434 = vextract.high.u32 %v432
        %v435 = vmul.u32.u64.compose %v431, %v426
        %v436 = vextract.low.u32 %v435
        %v437 = vextract.high.u32 %v435
        %v438 = vmul.u32 %v431, %v422
        %v439 = vadd.s32 %v434, %v436
        %vm440 = vc.u32 %v434, %v436
        %v441 = vadd.s32 %v437, 1
        %v442 = vsel %vm440, %v441, %v437
        %v443 = vadd.s32 %v438, %v442
        %v444 = vadd.s32 %v443, 536870912
        %v445 = vshrl.u32 %v444, 30
        %v446 = vshll.u32 %v445, 30
        %v447 = vsub.s32 %v443, %v446
        %vm448 = vcmp.lt.s32.totalorder %v447, 0
        %v449 = vsub.s32 0, %v447
        %v450 = vsel %vm448, %v449, %v447
        %v451 = vclz %v450
        %v452 = vsub.s32 %v451, 2
        %vm453 = vcmp.gt.s32.totalorder 0, %v452
        %v454 = vsel %vm453, 0, %v452
        %v455 = vsub.s32 32, %v454
        %v456 = vshll.u32 %v447, %v454
        %v457 = vshrl.u32 %v439, %v455
        %v458 = vor.u32 %v456, %v457
        %v459 = vsub.s32 4294967266, %v454
        %v460 = vadd.s32 %v459, 127
        %v461 = vshll.u32 %v460, 23
        %v462 = vor.u32 4788187, %v461
        %v463 = vand.u32 2147483647, %v462
        %v465 = vcvt.s32.f32 %v458
        %v466 = vmul.f32 %v465, %v463
        %v467 = vxor.u32 %v466, 2147483648
        %v468 = vsel %vm385, %v467, %v466
        %v469 = vsub.s32 4, %v445
        %v470 = vsel %vm385, %v469, %v445
        %v471 = vsel %vm384, %v379, %v468
        %v472 = vsel %vm384, 0, %v470
        %v473 = vcosq.f32.pop %v471
        %v474 = vsinq.f32.pop %v471
        %vm475 = vweird.f32 %v379
        %v476 = vadd.s32 %v472, 3
        %v477 = vand.u32 %v476, 3
        %vm478 = vcmp.lt.s32.totalorder %v477, 2
        %vm479 = vcmp.eq.s32.totalorder %v477, 0
        %v480 = vxor.u32 %v474, 2147483648
        %v481 = vsel %vm479, %v473, %v480
        %vm482 = vcmp.eq.s32.totalorder %v477, 2
        %v483 = vxor.u32 %v473, 2147483648
        %v484 = vsel %vm482, %v483, %v474
        %v485 = vsel %vm478, %v481, %v484
        %v486 = vsel %vm475, nan, %v485
        %v487 = vand.u32 2147483647, %v380
        %vm488 = vcmp.le.f32.partialorder %v487, 0.7853982
        %vm489 = vcmp.lt.s32.totalorder %v380, 0
        %v490 = vand.u32 %v380, 2139095040
        %v491 = vshrl.u32 %v490, 23
        %v492 = vsub.s32 %v491, 127
        %v493 = vand.u32 2147483647, %v380
        %v494 = vand.u32 %v493, 8388607
        %v495 = vor.u32 %v494, 8388608
        %v496 = vsub.s32 0, %v495
        %v497 = vadd.s32 %v492, 1
        %vm498 = vcmp.gt.s32.totalorder %v497, 0
        %v499 = vsel %vm498, %v497, 0
        %v500 = vshrl.u32 %v499, 5
        %v501 = vand.u32 %v499, 31
        %v502 = vsub.s32 32, %v501
        %v503 = vshrl.u32 683565275, %v502
        %v504 = vshll.u32 683565275, %v501
        %v505 = vshrl.u32 2475754826, %v502
        %v506 = vor.u32 %v504, %v505
        %v507 = vshll.u32 2475754826, %v501
        %v508 = vshrl.u32 2131351028, %v502
        %v509 = vor.u32 %v507, %v508
        %v510 = vshll.u32 2131351028, %v501
        %v511 = vshrl.u32 2102212464, %v502
        %v512 = vor.u32 %v510, %v511
        %v513 = vshll.u32 2102212464, %v501
        %v514 = vshrl.u32 920167782, %v502
        %v515 = vor.u32 %v513, %v514
        %v516 = vshll.u32 920167782, %v501
        %v517 = vshrl.u32 1326507024, %v502
        %v518 = vor.u32 %v516, %v517
        %vm519 = vcmp.lt.s32.totalorder %v500, 1
        %vm520 = vcmp.lt.s32.totalorder %v500, 2
        %vm521 = vcmp.lt.s32.totalorder %v500, 3
        %vm522 = vcmp.lt.s32.totalorder %v500, 4
        %v523 = vsel %vm519, %v503, %v506
        %v524 = vsel %vm522, %v512, 2102212464
        %v525 = vsel %vm521, %v509, %v524
        %v526 = vsel %vm520, %v523, %v525
        %v527 = vsel %vm519, %v506, %v509
        %v528 = vsel %vm522, %v515, 920167782
        %v529 = vsel %vm521, %v512, %v528
        %v530 = vsel %vm520, %v527, %v529
        %v531 = vsel %vm519, %v509, %v512
        %v532 = vsel %vm522, %v518, 1326507024
        %v533 = vsel %vm521, %v515, %v532
        %v534 = vsel %vm520, %v531, %v533
        %v535 = vshll.u32 %v495, 8
        %v536 = vmul.u32.u64.compose %v535, %v534
        %v537 = vextract.low.u32 %v536
        %v538 = vextract.high.u32 %v536
        %v539 = vmul.u32.u64.compose %v535, %v530
        %v540 = vextract.low.u32 %v539
        %v541 = vextract.high.u32 %v539
        %v542 = vmul.u32 %v535, %v526
        %v543 = vadd.s32 %v538, %v540
        %vm544 = vc.u32 %v538, %v540
        %v545 = vadd.s32 %v541, 1
        %v546 = vsel %vm544, %v545, %v541
        %v547 = vadd.s32 %v542, %v546
        %v548 = vadd.s32 %v547, 536870912
        %v549 = vshrl.u32 %v548, 30
        %v550 = vshll.u32 %v549, 30
        %v551 = vsub.s32 %v547, %v550
        %vm552 = vcmp.lt.s32.totalorder %v551, 0
        %v553 = vsub.s32 0, %v551
        %v554 = vsel %vm552, %v553, %v551
        %v555 = vclz %v554
        %v556 = vsub.s32 %v555, 2
        %vm557 = vcmp.gt.s32.totalorder 0, %v556
        %v558 = vsel %vm557, 0, %v556
        %v559 = vsub.s32 32, %v558
        %v560 = vshll.u32 %v551, %v558
        %v561 = vshrl.u32 %v543, %v559
        %v562 = vor.u32 %v560, %v561
        %v563 = vsub.s32 4294967266, %v558
        %v564 = vadd.s32 %v563, 127
        %v565 = vshll.u32 %v564, 23
        %v566 = vor.u32 4788187, %v565
        %v567 = vand.u32 2147483647, %v566
        %v569 = vcvt.s32.f32 %v562
        %v570 = vmul.f32 %v569, %v567
        %v571 = vxor.u32 %v570, 2147483648
        %v572 = vsel %vm489, %v571, %v570
        %v573 = vsub.s32 4, %v549
        %v574 = vsel %vm489, %v573, %v549
        %v575 = vsel %vm488, %v380, %v572
        %v576 = vsel %vm488, 0, %v574
        %v577 = vcosq.f32.pop %v575
        %v578 = vsinq.f32.pop %v575
        %vm579 = vweird.f32 %v380
        %v580 = vadd.s32 %v576, 3
        %v581 = vand.u32 %v580, 3
        %vm582 = vcmp.lt.s32.totalorder %v581, 2
        %vm583 = vcmp.eq.s32.totalorder %v581, 0
        %v584 = vxor.u32 %v578, 2147483648
        %v585 = vsel %vm583, %v577, %v584
        %vm586 = vcmp.eq.s32.totalorder %v581, 2
        %v587 = vxor.u32 %v577, 2147483648
        %v588 = vsel %vm586, %v587, %v578
        %v589 = vsel %vm582, %v585, %v588
        %v590 = vsel %vm579, nan, %v589
        %v591 = vand.u32 2147483647, %v381
        %vm592 = vcmp.le.f32.partialorder %v591, 0.7853982
        %vm593 = vcmp.lt.s32.totalorder %v381, 0
        %v594 = vand.u32 %v381, 2139095040
        %v595 = vshrl.u32 %v594, 23
        %v596 = vsub.s32 %v595, 127
        %v597 = vand.u32 2147483647, %v381
        %v598 = vand.u32 %v597, 8388607
        %v599 = vor.u32 %v598, 8388608
        %v600 = vsub.s32 0, %v599
        %v601 = vadd.s32 %v596, 1
        %vm602 = vcmp.gt.s32.totalorder %v601, 0
        %v603 = vsel %vm602, %v601, 0
        %v604 = vshrl.u32 %v603, 5
        %v605 = vand.u32 %v603, 31
        %v606 = vsub.s32 32, %v605
        %v607 = vshrl.u32 683565275, %v606
        %v608 = vshll.u32 683565275, %v605
        %v609 = vshrl.u32 2475754826, %v606
        %v610 = vor.u32 %v608, %v609
        %v611 = vshll.u32 2475754826, %v605
        %v612 = vshrl.u32 2131351028, %v606
        %v613 = vor.u32 %v611, %v612
        %v614 = vshll.u32 2131351028, %v605
        %v615 = vshrl.u32 2102212464, %v606
        %v616 = vor.u32 %v614, %v615
        %v617 = vshll.u32 2102212464, %v605
        %v618 = vshrl.u32 920167782, %v606
        %v619 = vor.u32 %v617, %v618
        %v620 = vshll.u32 920167782, %v605
        %v621 = vshrl.u32 1326507024, %v606
        %v622 = vor.u32 %v620, %v621
        %vm623 = vcmp.lt.s32.totalorder %v604, 1
        %vm624 = vcmp.lt.s32.totalorder %v604, 2
        %vm625 = vcmp.lt.s32.totalorder %v604, 3
        %vm626 = vcmp.lt.s32.totalorder %v604, 4
        %v627 = vsel %vm623, %v607, %v610
        %v628 = vsel %vm626, %v616, 2102212464
        %v629 = vsel %vm625, %v613, %v628
        %v630 = vsel %vm624, %v627, %v629
        %v631 = vsel %vm623, %v610, %v613
        %v632 = vsel %vm626, %v619, 920167782
        %v633 = vsel %vm625, %v616, %v632
        %v634 = vsel %vm624, %v631, %v633
        %v635 = vsel %vm623, %v613, %v616
        %v636 = vsel %vm626, %v622, 1326507024
        %v637 = vsel %vm625, %v619, %v636
        %v638 = vsel %vm624, %v635, %v637
        %v639 = vshll.u32 %v599, 8
        %v640 = vmul.u32.u64.compose %v639, %v638
        %v641 = vextract.low.u32 %v640
        %v642 = vextract.high.u32 %v640
        %v643 = vmul.u32.u64.compose %v639, %v634
        %v644 = vextract.low.u32 %v643
        %v645 = vextract.high.u32 %v643
        %v646 = vmul.u32 %v639, %v630
        %v647 = vadd.s32 %v642, %v644
        %vm648 = vc.u32 %v642, %v644
        %v649 = vadd.s32 %v645, 1
        %v650 = vsel %vm648, %v649, %v645
        %v651 = vadd.s32 %v646, %v650
        %v652 = vadd.s32 %v651, 536870912
        %v653 = vshrl.u32 %v652, 30
        %v654 = vshll.u32 %v653, 30
        %v655 = vsub.s32 %v651, %v654
        %vm656 = vcmp.lt.s32.totalorder %v655, 0
        %v657 = vsub.s32 0, %v655
        %v658 = vsel %vm656, %v657, %v655
        %v659 = vclz %v658
        %v660 = vsub.s32 %v659, 2
        %vm661 = vcmp.gt.s32.totalorder 0, %v660
        %v662 = vsel %vm661, 0, %v660
        %v663 = vsub.s32 32, %v662
        %v664 = vshll.u32 %v655, %v662
        %v665 = vshrl.u32 %v647, %v663
        %v666 = vor.u32 %v664, %v665
        %v667 = vsub.s32 4294967266, %v662
        %v668 = vadd.s32 %v667, 127
        %v669 = vshll.u32 %v668, 23
        %v670 = vor.u32 4788187, %v669
        %v671 = vand.u32 2147483647, %v670
        %v673 = vcvt.s32.f32 %v666
        %v674 = vmul.f32 %v673, %v671
        %v675 = vxor.u32 %v674, 2147483648
        %v676 = vsel %vm593, %v675, %v674
        %v677 = vsub.s32 4, %v653
        %v678 = vsel %vm593, %v677, %v653
        %v679 = vsel %vm592, %v381, %v676
        %v680 = vsel %vm592, 0, %v678
        %v681 = vcosq.f32.pop %v679
        %v682 = vsinq.f32.pop %v679
        %vm683 = vweird.f32 %v381
        %v684 = vadd.s32 %v680, 3
        %v685 = vand.u32 %v684, 3
        %vm686 = vcmp.lt.s32.totalorder %v685, 2
        %vm687 = vcmp.eq.s32.totalorder %v685, 0
        %v688 = vxor.u32 %v682, 2147483648
        %v689 = vsel %vm687, %v681, %v688
        %vm690 = vcmp.eq.s32.totalorder %v685, 2
        %v691 = vxor.u32 %v681, 2147483648
        %v692 = vsel %vm690, %v691, %v682
        %v693 = vsel %vm686, %v689, %v692
        %v694 = vsel %vm683, nan, %v693
        %v695 = vand.u32 2147483647, %v382
        %vm696 = vcmp.le.f32.partialorder %v695, 0.7853982
        %vm697 = vcmp.lt.s32.totalorder %v382, 0
        %v698 = vand.u32 %v382, 2139095040
        %v699 = vshrl.u32 %v698, 23
        %v700 = vsub.s32 %v699, 127
        %v701 = vand.u32 2147483647, %v382
        %v702 = vand.u32 %v701, 8388607
        %v703 = vor.u32 %v702, 8388608
        %v704 = vsub.s32 0, %v703
        %v705 = vadd.s32 %v700, 1
        %vm706 = vcmp.gt.s32.totalorder %v705, 0
        %v707 = vsel %vm706, %v705, 0
        %v708 = vshrl.u32 %v707, 5
        %v709 = vand.u32 %v707, 31
        %v710 = vsub.s32 32, %v709
        %v711 = vshrl.u32 683565275, %v710
        %v712 = vshll.u32 683565275, %v709
        %v713 = vshrl.u32 2475754826, %v710
        %v714 = vor.u32 %v712, %v713
        %v715 = vshll.u32 2475754826, %v709
        %v716 = vshrl.u32 2131351028, %v710
        %v717 = vor.u32 %v715, %v716
        %v718 = vshll.u32 2131351028, %v709
        %v719 = vshrl.u32 2102212464, %v710
        %v720 = vor.u32 %v718, %v719
        %v721 = vshll.u32 2102212464, %v709
        %v722 = vshrl.u32 920167782, %v710
        %v723 = vor.u32 %v721, %v722
        %v724 = vshll.u32 920167782, %v709
        %v725 = vshrl.u32 1326507024, %v710
        %v726 = vor.u32 %v724, %v725
        %vm727 = vcmp.lt.s32.totalorder %v708, 1
        %vm728 = vcmp.lt.s32.totalorder %v708, 2
        %vm729 = vcmp.lt.s32.totalorder %v708, 3
        %vm730 = vcmp.lt.s32.totalorder %v708, 4
        %v731 = vsel %vm727, %v711, %v714
        %v732 = vsel %vm730, %v720, 2102212464
        %v733 = vsel %vm729, %v717, %v732
        %v734 = vsel %vm728, %v731, %v733
        %v735 = vsel %vm727, %v714, %v717
        %v736 = vsel %vm730, %v723, 920167782
        %v737 = vsel %vm729, %v720, %v736
        %v738 = vsel %vm728, %v735, %v737
        %v739 = vsel %vm727, %v717, %v720
        %v740 = vsel %vm730, %v726, 1326507024
        %v741 = vsel %vm729, %v723, %v740
        %v742 = vsel %vm728, %v739, %v741
        %v743 = vshll.u32 %v703, 8
        %v744 = vmul.u32.u64.compose %v743, %v742
        %v745 = vextract.low.u32 %v744
        %v746 = vextract.high.u32 %v744
        %v747 = vmul.u32.u64.compose %v743, %v738
        %v748 = vextract.low.u32 %v747
        %v749 = vextract.high.u32 %v747
        %v750 = vmul.u32 %v743, %v734
        %v751 = vadd.s32 %v746, %v748
        %vm752 = vc.u32 %v746, %v748
        %v753 = vadd.s32 %v749, 1
        %v754 = vsel %vm752, %v753, %v749
        %v755 = vadd.s32 %v750, %v754
        %v756 = vadd.s32 %v755, 536870912
        %v757 = vshrl.u32 %v756, 30
        %v758 = vshll.u32 %v757, 30
        %v759 = vsub.s32 %v755, %v758
        %vm760 = vcmp.lt.s32.totalorder %v759, 0
        %v761 = vsub.s32 0, %v759
        %v762 = vsel %vm760, %v761, %v759
        %v763 = vclz %v762
        %v764 = vsub.s32 %v763, 2
        %vm765 = vcmp.gt.s32.totalorder 0, %v764
        %v766 = vsel %vm765, 0, %v764
        %v767 = vsub.s32 32, %v766
        %v768 = vshll.u32 %v759, %v766
        %v769 = vshrl.u32 %v751, %v767
        %v770 = vor.u32 %v768, %v769
        %v771 = vsub.s32 4294967266, %v766
        %v772 = vadd.s32 %v771, 127
        %v773 = vshll.u32 %v772, 23
        %v774 = vor.u32 4788187, %v773
        %v775 = vand.u32 2147483647, %v774
        %v777 = vcvt.s32.f32 %v770
        %v778 = vmul.f32 %v777, %v775
        %v779 = vxor.u32 %v778, 2147483648
        %v780 = vsel %vm697, %v779, %v778
        %v781 = vsub.s32 4, %v757
        %v782 = vsel %vm697, %v781, %v757
        %v783 = vsel %vm696, %v382, %v780
        %v784 = vsel %vm696, 0, %v782
        %v785 = vcosq.f32.pop %v783
        %v786 = vsinq.f32.pop %v783
        %vm787 = vweird.f32 %v382
        %v788 = vadd.s32 %v784, 3
        %v789 = vand.u32 %v788, 3
        %vm790 = vcmp.lt.s32.totalorder %v789, 2
        %vm791 = vcmp.eq.s32.totalorder %v789, 0
        %v792 = vxor.u32 %v786, 2147483648
        %v793 = vsel %vm791, %v785, %v792
        %vm794 = vcmp.eq.s32.totalorder %v789, 2
        %v795 = vxor.u32 %v785, 2147483648
        %v796 = vsel %vm794, %v795, %v786
        %v797 = vsel %vm790, %v793, %v796
        %v798 = vsel %vm787, nan, %v797
        %v799 = vand.u32 2147483647, %v379
        %vm800 = vcmp.le.f32.partialorder %v799, 0.7853982
        %vm801 = vcmp.lt.s32.totalorder %v379, 0
        %v802 = vand.u32 %v379, 2139095040
        %v803 = vshrl.u32 %v802, 23
        %v804 = vsub.s32 %v803, 127
        %v805 = vand.u32 2147483647, %v379
        %v806 = vand.u32 %v805, 8388607
        %v807 = vor.u32 %v806, 8388608
        %v808 = vsub.s32 0, %v807
        %v809 = vadd.s32 %v804, 1
        %vm810 = vcmp.gt.s32.totalorder %v809, 0
        %v811 = vsel %vm810, %v809, 0
        %v812 = vshrl.u32 %v811, 5
        %v813 = vand.u32 %v811, 31
        %v814 = vsub.s32 32, %v813
        %v815 = vshrl.u32 683565275, %v814
        %v816 = vshll.u32 683565275, %v813
        %v817 = vshrl.u32 2475754826, %v814
        %v818 = vor.u32 %v816, %v817
        %v819 = vshll.u32 2475754826, %v813
        %v820 = vshrl.u32 2131351028, %v814
        %v821 = vor.u32 %v819, %v820
        %v822 = vshll.u32 2131351028, %v813
        %v823 = vshrl.u32 2102212464, %v814
        %v824 = vor.u32 %v822, %v823
        %v825 = vshll.u32 2102212464, %v813
        %v826 = vshrl.u32 920167782, %v814
        %v827 = vor.u32 %v825, %v826
        %v828 = vshll.u32 920167782, %v813
        %v829 = vshrl.u32 1326507024, %v814
        %v830 = vor.u32 %v828, %v829
        %vm831 = vcmp.lt.s32.totalorder %v812, 1
        %vm832 = vcmp.lt.s32.totalorder %v812, 2
        %vm833 = vcmp.lt.s32.totalorder %v812, 3
        %vm834 = vcmp.lt.s32.totalorder %v812, 4
        %v835 = vsel %vm831, %v815, %v818
        %v836 = vsel %vm834, %v824, 2102212464
        %v837 = vsel %vm833, %v821, %v836
        %v838 = vsel %vm832, %v835, %v837
        %v839 = vsel %vm831, %v818, %v821
        %v840 = vsel %vm834, %v827, 920167782
        %v841 = vsel %vm833, %v824, %v840
        %v842 = vsel %vm832, %v839, %v841
        %v843 = vsel %vm831, %v821, %v824
        %v844 = vsel %vm834, %v830, 1326507024
        %v845 = vsel %vm833, %v827, %v844
        %v846 = vsel %vm832, %v843, %v845
        %v847 = vshll.u32 %v807, 8
        %v848 = vmul.u32.u64.compose %v847, %v846
        %v849 = vextract.low.u32 %v848
        %v850 = vextract.high.u32 %v848
        %v851 = vmul.u32.u64.compose %v847, %v842
        %v852 = vextract.low.u32 %v851
        %v853 = vextract.high.u32 %v851
        %v854 = vmul.u32 %v847, %v838
        %v855 = vadd.s32 %v850, %v852
        %vm856 = vc.u32 %v850, %v852
        %v857 = vadd.s32 %v853, 1
        %v858 = vsel %vm856, %v857, %v853
        %v859 = vadd.s32 %v854, %v858
        %v860 = vadd.s32 %v859, 536870912
        %v861 = vshrl.u32 %v860, 30
        %v862 = vshll.u32 %v861, 30
        %v863 = vsub.s32 %v859, %v862
        %vm864 = vcmp.lt.s32.totalorder %v863, 0
        %v865 = vsub.s32 0, %v863
        %v866 = vsel %vm864, %v865, %v863
        %v867 = vclz %v866
        %v868 = vsub.s32 %v867, 2
        %vm869 = vcmp.gt.s32.totalorder 0, %v868
        %v870 = vsel %vm869, 0, %v868
        %v871 = vsub.s32 32, %v870
        %v872 = vshll.u32 %v863, %v870
        %v873 = vshrl.u32 %v855, %v871
        %v874 = vor.u32 %v872, %v873
        %v875 = vsub.s32 4294967266, %v870
        %v876 = vadd.s32 %v875, 127
        %v877 = vshll.u32 %v876, 23
        %v878 = vor.u32 4788187, %v877
        %v879 = vand.u32 2147483647, %v878
        %v881 = vcvt.s32.f32 %v874
        %v882 = vmul.f32 %v881, %v879
        %v883 = vxor.u32 %v882, 2147483648
        %v884 = vsel %vm801, %v883, %v882
        %v885 = vsub.s32 4, %v861
        %v886 = vsel %vm801, %v885, %v861
        %v887 = vsel %vm800, %v379, %v884
        %v888 = vsel %vm800, 0, %v886
        %v889 = vcosq.f32.pop %v887
        %v890 = vsinq.f32.pop %v887
        %vm891 = vweird.f32 %v379
        %v892 = vand.u32 %v888, 3
        %vm893 = vcmp.lt.s32.totalorder %v892, 2
        %vm894 = vcmp.eq.s32.totalorder %v892, 0
        %v895 = vxor.u32 %v890, 2147483648
        %v896 = vsel %vm894, %v889, %v895
        %vm897 = vcmp.eq.s32.totalorder %v892, 2
        %v898 = vxor.u32 %v889, 2147483648
        %v899 = vsel %vm897, %v898, %v890
        %v900 = vsel %vm893, %v896, %v899
        %v901 = vsel %vm891, nan, %v900
        %v902 = vand.u32 2147483647, %v380
        %vm903 = vcmp.le.f32.partialorder %v902, 0.7853982
        %vm904 = vcmp.lt.s32.totalorder %v380, 0
        %v905 = vand.u32 %v380, 2139095040
        %v906 = vshrl.u32 %v905, 23
        %v907 = vsub.s32 %v906, 127
        %v908 = vand.u32 2147483647, %v380
        %v909 = vand.u32 %v908, 8388607
        %v910 = vor.u32 %v909, 8388608
        %v911 = vsub.s32 0, %v910
        %v912 = vadd.s32 %v907, 1
        %vm913 = vcmp.gt.s32.totalorder %v912, 0
        %v914 = vsel %vm913, %v912, 0
        %v915 = vshrl.u32 %v914, 5
        %v916 = vand.u32 %v914, 31
        %v917 = vsub.s32 32, %v916
        %v918 = vshrl.u32 683565275, %v917
        %v919 = vshll.u32 683565275, %v916
        %v920 = vshrl.u32 2475754826, %v917
        %v921 = vor.u32 %v919, %v920
        %v922 = vshll.u32 2475754826, %v916
        %v923 = vshrl.u32 2131351028, %v917
        %v924 = vor.u32 %v922, %v923
        %v925 = vshll.u32 2131351028, %v916
        %v926 = vshrl.u32 2102212464, %v917
        %v927 = vor.u32 %v925, %v926
        %v928 = vshll.u32 2102212464, %v916
        %v929 = vshrl.u32 920167782, %v917
        %v930 = vor.u32 %v928, %v929
        %v931 = vshll.u32 920167782, %v916
        %v932 = vshrl.u32 1326507024, %v917
        %v933 = vor.u32 %v931, %v932
        %vm934 = vcmp.lt.s32.totalorder %v915, 1
        %vm935 = vcmp.lt.s32.totalorder %v915, 2
        %vm936 = vcmp.lt.s32.totalorder %v915, 3
        %vm937 = vcmp.lt.s32.totalorder %v915, 4
        %v938 = vsel %vm934, %v918, %v921
        %v939 = vsel %vm937, %v927, 2102212464
        %v940 = vsel %vm936, %v924, %v939
        %v941 = vsel %vm935, %v938, %v940
        %v942 = vsel %vm934, %v921, %v924
        %v943 = vsel %vm937, %v930, 920167782
        %v944 = vsel %vm936, %v927, %v943
        %v945 = vsel %vm935, %v942, %v944
        %v946 = vsel %vm934, %v924, %v927
        %v947 = vsel %vm937, %v933, 1326507024
        %v948 = vsel %vm936, %v930, %v947
        %v949 = vsel %vm935, %v946, %v948
        %v950 = vshll.u32 %v910, 8
        %v951 = vmul.u32.u64.compose %v950, %v949
        %v952 = vextract.low.u32 %v951
        %v953 = vextract.high.u32 %v951
        %v954 = vmul.u32.u64.compose %v950, %v945
        %v955 = vextract.low.u32 %v954
        %v956 = vextract.high.u32 %v954
        %v957 = vmul.u32 %v950, %v941
        %v958 = vadd.s32 %v953, %v955
        %vm959 = vc.u32 %v953, %v955
        %v960 = vadd.s32 %v956, 1
        %v961 = vsel %vm959, %v960, %v956
        %v962 = vadd.s32 %v957, %v961
        %v963 = vadd.s32 %v962, 536870912
        %v964 = vshrl.u32 %v963, 30
        %v965 = vshll.u32 %v964, 30
        %v966 = vsub.s32 %v962, %v965
        %vm967 = vcmp.lt.s32.totalorder %v966, 0
        %v968 = vsub.s32 0, %v966
        %v969 = vsel %vm967, %v968, %v966
        %v970 = vclz %v969
        %v971 = vsub.s32 %v970, 2
        %vm972 = vcmp.gt.s32.totalorder 0, %v971
        %v973 = vsel %vm972, 0, %v971
        %v974 = vsub.s32 32, %v973
        %v975 = vshll.u32 %v966, %v973
        %v976 = vshrl.u32 %v958, %v974
        %v977 = vor.u32 %v975, %v976
        %v978 = vsub.s32 4294967266, %v973
        %v979 = vadd.s32 %v978, 127
        %v980 = vshll.u32 %v979, 23
        %v981 = vor.u32 4788187, %v980
        %v982 = vand.u32 2147483647, %v981
        %v984 = vcvt.s32.f32 %v977
        %v985 = vmul.f32 %v984, %v982
        %v986 = vxor.u32 %v985, 2147483648
        %v987 = vsel %vm904, %v986, %v985
        %v988 = vsub.s32 4, %v964
        %v989 = vsel %vm904, %v988, %v964
        %v990 = vsel %vm903, %v380, %v987
        %v991 = vsel %vm903, 0, %v989
        %v992 = vcosq.f32.pop %v990
        %v993 = vsinq.f32.pop %v990
        %vm994 = vweird.f32 %v380
        %v995 = vand.u32 %v991, 3
        %vm996 = vcmp.lt.s32.totalorder %v995, 2
        %vm997 = vcmp.eq.s32.totalorder %v995, 0
        %v998 = vxor.u32 %v993, 2147483648
        %v999 = vsel %vm997, %v992, %v998
        %vm1000 = vcmp.eq.s32.totalorder %v995, 2
        %v1001 = vxor.u32 %v992, 2147483648
        %v1002 = vsel %vm1000, %v1001, %v993
        %v1003 = vsel %vm996, %v999, %v1002
        %v1004 = vsel %vm994, nan, %v1003
        %v1005 = vand.u32 2147483647, %v381
        %vm1006 = vcmp.le.f32.partialorder %v1005, 0.7853982
        %vm1007 = vcmp.lt.s32.totalorder %v381, 0
        %v1008 = vand.u32 %v381, 2139095040
        %v1009 = vshrl.u32 %v1008, 23
        %v1010 = vsub.s32 %v1009, 127
        %v1011 = vand.u32 2147483647, %v381
        %v1012 = vand.u32 %v1011, 8388607
        %v1013 = vor.u32 %v1012, 8388608
        %v1014 = vsub.s32 0, %v1013
        %v1015 = vadd.s32 %v1010, 1
        %vm1016 = vcmp.gt.s32.totalorder %v1015, 0
        %v1017 = vsel %vm1016, %v1015, 0
        %v1018 = vshrl.u32 %v1017, 5
        %v1019 = vand.u32 %v1017, 31
        %v1020 = vsub.s32 32, %v1019
        %v1021 = vshrl.u32 683565275, %v1020
        %v1022 = vshll.u32 683565275, %v1019
        %v1023 = vshrl.u32 2475754826, %v1020
        %v1024 = vor.u32 %v1022, %v1023
        %v1025 = vshll.u32 2475754826, %v1019
        %v1026 = vshrl.u32 2131351028, %v1020
        %v1027 = vor.u32 %v1025, %v1026
        %v1028 = vshll.u32 2131351028, %v1019
        %v1029 = vshrl.u32 2102212464, %v1020
        %v1030 = vor.u32 %v1028, %v1029
        %v1031 = vshll.u32 2102212464, %v1019
        %v1032 = vshrl.u32 920167782, %v1020
        %v1033 = vor.u32 %v1031, %v1032
        %v1034 = vshll.u32 920167782, %v1019
        %v1035 = vshrl.u32 1326507024, %v1020
        %v1036 = vor.u32 %v1034, %v1035
        %vm1037 = vcmp.lt.s32.totalorder %v1018, 1
        %vm1038 = vcmp.lt.s32.totalorder %v1018, 2
        %vm1039 = vcmp.lt.s32.totalorder %v1018, 3
        %vm1040 = vcmp.lt.s32.totalorder %v1018, 4
        %v1041 = vsel %vm1037, %v1021, %v1024
        %v1042 = vsel %vm1040, %v1030, 2102212464
        %v1043 = vsel %vm1039, %v1027, %v1042
        %v1044 = vsel %vm1038, %v1041, %v1043
        %v1045 = vsel %vm1037, %v1024, %v1027
        %v1046 = vsel %vm1040, %v1033, 920167782
        %v1047 = vsel %vm1039, %v1030, %v1046
        %v1048 = vsel %vm1038, %v1045, %v1047
        %v1049 = vsel %vm1037, %v1027, %v1030
        %v1050 = vsel %vm1040, %v1036, 1326507024
        %v1051 = vsel %vm1039, %v1033, %v1050
        %v1052 = vsel %vm1038, %v1049, %v1051
        %v1053 = vshll.u32 %v1013, 8
        %v1054 = vmul.u32.u64.compose %v1053, %v1052
        %v1055 = vextract.low.u32 %v1054
        %v1056 = vextract.high.u32 %v1054
        %v1057 = vmul.u32.u64.compose %v1053, %v1048
        %v1058 = vextract.low.u32 %v1057
        %v1059 = vextract.high.u32 %v1057
        %v1060 = vmul.u32 %v1053, %v1044
        %v1061 = vadd.s32 %v1056, %v1058
        %vm1062 = vc.u32 %v1056, %v1058
        %v1063 = vadd.s32 %v1059, 1
        %v1064 = vsel %vm1062, %v1063, %v1059
        %v1065 = vadd.s32 %v1060, %v1064
        %v1066 = vadd.s32 %v1065, 536870912
        %v1067 = vshrl.u32 %v1066, 30
        %v1068 = vshll.u32 %v1067, 30
        %v1069 = vsub.s32 %v1065, %v1068
        %vm1070 = vcmp.lt.s32.totalorder %v1069, 0
        %v1071 = vsub.s32 0, %v1069
        %v1072 = vsel %vm1070, %v1071, %v1069
        %v1073 = vclz %v1072
        %v1074 = vsub.s32 %v1073, 2
        %vm1075 = vcmp.gt.s32.totalorder 0, %v1074
        %v1076 = vsel %vm1075, 0, %v1074
        %v1077 = vsub.s32 32, %v1076
        %v1078 = vshll.u32 %v1069, %v1076
        %v1079 = vshrl.u32 %v1061, %v1077
        %v1080 = vor.u32 %v1078, %v1079
        %v1081 = vsub.s32 4294967266, %v1076
        %v1082 = vadd.s32 %v1081, 127
        %v1083 = vshll.u32 %v1082, 23
        %v1084 = vor.u32 4788187, %v1083
        %v1085 = vand.u32 2147483647, %v1084
        %v1087 = vcvt.s32.f32 %v1080
        %v1088 = vmul.f32 %v1087, %v1085
        %v1089 = vxor.u32 %v1088, 2147483648
        %v1090 = vsel %vm1007, %v1089, %v1088
        %v1091 = vsub.s32 4, %v1067
        %v1092 = vsel %vm1007, %v1091, %v1067
        %v1093 = vsel %vm1006, %v381, %v1090
        %v1094 = vsel %vm1006, 0, %v1092
        %v1095 = vcosq.f32.pop %v1093
        %v1096 = vsinq.f32.pop %v1093
        %vm1097 = vweird.f32 %v381
        %v1098 = vand.u32 %v1094, 3
        %vm1099 = vcmp.lt.s32.totalorder %v1098, 2
        %vm1100 = vcmp.eq.s32.totalorder %v1098, 0
        %v1101 = vxor.u32 %v1096, 2147483648
        %v1102 = vsel %vm1100, %v1095, %v1101
        %vm1103 = vcmp.eq.s32.totalorder %v1098, 2
        %v1104 = vxor.u32 %v1095, 2147483648
        %v1105 = vsel %vm1103, %v1104, %v1096
        %v1106 = vsel %vm1099, %v1102, %v1105
        %v1107 = vsel %vm1097, nan, %v1106
        %v1108 = vand.u32 2147483647, %v382
        %vm1109 = vcmp.le.f32.partialorder %v1108, 0.7853982
        %vm1110 = vcmp.lt.s32.totalorder %v382, 0
        %v1111 = vand.u32 %v382, 2139095040
        %v1112 = vshrl.u32 %v1111, 23
        %v1113 = vsub.s32 %v1112, 127
        %v1114 = vand.u32 2147483647, %v382
        %v1115 = vand.u32 %v1114, 8388607
        %v1116 = vor.u32 %v1115, 8388608
        %v1117 = vsub.s32 0, %v1116
        %v1118 = vadd.s32 %v1113, 1
        %vm1119 = vcmp.gt.s32.totalorder %v1118, 0
        %v1120 = vsel %vm1119, %v1118, 0
        %v1121 = vshrl.u32 %v1120, 5
        %v1122 = vand.u32 %v1120, 31
        %v1123 = vsub.s32 32, %v1122
        %v1124 = vshrl.u32 683565275, %v1123
        %v1125 = vshll.u32 683565275, %v1122
        %v1126 = vshrl.u32 2475754826, %v1123
        %v1127 = vor.u32 %v1125, %v1126
        %v1128 = vshll.u32 2475754826, %v1122
        %v1129 = vshrl.u32 2131351028, %v1123
        %v1130 = vor.u32 %v1128, %v1129
        %v1131 = vshll.u32 2131351028, %v1122
        %v1132 = vshrl.u32 2102212464, %v1123
        %v1133 = vor.u32 %v1131, %v1132
        %v1134 = vshll.u32 2102212464, %v1122
        %v1135 = vshrl.u32 920167782, %v1123
        %v1136 = vor.u32 %v1134, %v1135
        %v1137 = vshll.u32 920167782, %v1122
        %v1138 = vshrl.u32 1326507024, %v1123
        %v1139 = vor.u32 %v1137, %v1138
        %vm1140 = vcmp.lt.s32.totalorder %v1121, 1
        %vm1141 = vcmp.lt.s32.totalorder %v1121, 2
        %vm1142 = vcmp.lt.s32.totalorder %v1121, 3
        %vm1143 = vcmp.lt.s32.totalorder %v1121, 4
        %v1144 = vsel %vm1140, %v1124, %v1127
        %v1145 = vsel %vm1143, %v1133, 2102212464
        %v1146 = vsel %vm1142, %v1130, %v1145
        %v1147 = vsel %vm1141, %v1144, %v1146
        %v1148 = vsel %vm1140, %v1127, %v1130
        %v1149 = vsel %vm1143, %v1136, 920167782
        %v1150 = vsel %vm1142, %v1133, %v1149
        %v1151 = vsel %vm1141, %v1148, %v1150
        %v1152 = vsel %vm1140, %v1130, %v1133
        %v1153 = vsel %vm1143, %v1139, 1326507024
        %v1154 = vsel %vm1142, %v1136, %v1153
        %v1155 = vsel %vm1141, %v1152, %v1154
        %v1156 = vshll.u32 %v1116, 8
        %v1157 = vmul.u32.u64.compose %v1156, %v1155
        %v1158 = vextract.low.u32 %v1157
        %v1159 = vextract.high.u32 %v1157
        %v1160 = vmul.u32.u64.compose %v1156, %v1151
        %v1161 = vextract.low.u32 %v1160
        %v1162 = vextract.high.u32 %v1160
        %v1163 = vmul.u32 %v1156, %v1147
        %v1164 = vadd.s32 %v1159, %v1161
        %vm1165 = vc.u32 %v1159, %v1161
        %v1166 = vadd.s32 %v1162, 1
        %v1167 = vsel %vm1165, %v1166, %v1162
        %v1168 = vadd.s32 %v1163, %v1167
        %v1169 = vadd.s32 %v1168, 536870912
        %v1170 = vshrl.u32 %v1169, 30
        %v1171 = vshll.u32 %v1170, 30
        %v1172 = vsub.s32 %v1168, %v1171
        %vm1173 = vcmp.lt.s32.totalorder %v1172, 0
        %v1174 = vsub.s32 0, %v1172
        %v1175 = vsel %vm1173, %v1174, %v1172
        %v1176 = vclz %v1175
        %v1177 = vsub.s32 %v1176, 2
        %vm1178 = vcmp.gt.s32.totalorder 0, %v1177
        %v1179 = vsel %vm1178, 0, %v1177
        %v1180 = vsub.s32 32, %v1179
        %v1181 = vshll.u32 %v1172, %v1179
        %v1182 = vshrl.u32 %v1164, %v1180
        %v1183 = vor.u32 %v1181, %v1182
        %v1184 = vsub.s32 4294967266, %v1179
        %v1185 = vadd.s32 %v1184, 127
        %v1186 = vshll.u32 %v1185, 23
        %v1187 = vor.u32 4788187, %v1186
        %v1188 = vand.u32 2147483647, %v1187
        %v1190 = vcvt.s32.f32 %v1183
        %v1191 = vmul.f32 %v1190, %v1188
        %v1192 = vxor.u32 %v1191, 2147483648
        %v1193 = vsel %vm1110, %v1192, %v1191
        %v1194 = vsub.s32 4, %v1170
        %v1195 = vsel %vm1110, %v1194, %v1170
        %v1196 = vsel %vm1109, %v382, %v1193
        %v1197 = vsel %vm1109, 0, %v1195
        %v1198 = vcosq.f32.pop %v1196
        %v1199 = vsinq.f32.pop %v1196
        %vm1200 = vweird.f32 %v382
        %v1201 = vand.u32 %v1197, 3
        %vm1202 = vcmp.lt.s32.totalorder %v1201, 2
        %vm1203 = vcmp.eq.s32.totalorder %v1201, 0
        %v1204 = vxor.u32 %v1199, 2147483648
        %v1205 = vsel %vm1203, %v1198, %v1204
        %vm1206 = vcmp.eq.s32.totalorder %v1201, 2
        %v1207 = vxor.u32 %v1198, 2147483648
        %v1208 = vsel %vm1206, %v1207, %v1199
        %v1209 = vsel %vm1202, %v1205, %v1208
        %v1210 = vsel %vm1200, nan, %v1209
        %v1211 = vlaneseq
        %v1212 = vshrl.u32 %v1211, 7
        %v1213 = vsub.s32 0, %v1212
        %v1214 = vrot.slane %v372, %v1213
        %1216 = vbcast.lane.b32.xlu0 %v1214, 256
        %v1217 = vpop.permute.xlu0 %1216
        %s1219 = sor.u32 256, 8
        %1220 = vbcast.lane.b32.xlu0 %v1214, %s1219
        %v1221 = vpop.permute.xlu0 %1220
        %s1223 = sor.u32 256, 16
        %1224 = vbcast.lane.b32.xlu0 %v1214, %s1223
        %v1225 = vpop.permute.xlu0 %1224
        %s1227 = sor.u32 256, 24
        %1228 = vbcast.lane.b32.xlu0 %v1214, %s1227
        %v1229 = vpop.permute.xlu0 %1228
        %v1230 = vlaneseq
        %v1231 = vshrl.u32 %v1230, 7
        %v1232 = vsub.s32 1, %v1231
        %v1233 = vrot.slane %v372, %v1232
        %1235 = vbcast.lane.b32.xlu0 %v1233, 256
        %v1236 = vpop.permute.xlu0 %1235
        %s1238 = sor.u32 256, 8
        %1239 = vbcast.lane.b32.xlu0 %v1233, %s1238
        %v1240 = vpop.permute.xlu0 %1239
        %s1242 = sor.u32 256, 16
        %1243 = vbcast.lane.b32.xlu0 %v1233, %s1242
        %v1244 = vpop.permute.xlu0 %1243
        %s1246 = sor.u32 256, 24
        %1247 = vbcast.lane.b32.xlu0 %v1233, %s1246
        %v1248 = vpop.permute.xlu0 %1247
        %v1249 = vlaneseq
        %v1250 = vshrl.u32 %v1249, 7
        %v1251 = vsub.s32 2, %v1250
        %v1252 = vrot.slane %v372, %v1251
        %1254 = vbcast.lane.b32.xlu0 %v1252, 256
        %v1255 = vpop.permute.xlu0 %1254
        %s1257 = sor.u32 256, 8
        %1258 = vbcast.lane.b32.xlu0 %v1252, %s1257
        %v1259 = vpop.permute.xlu0 %1258
        %s1261 = sor.u32 256, 16
        %1262 = vbcast.lane.b32.xlu0 %v1252, %s1261
        %v1263 = vpop.permute.xlu0 %1262
        %s1265 = sor.u32 256, 24
        %1266 = vbcast.lane.b32.xlu0 %v1252, %s1265
        %v1267 = vpop.permute.xlu0 %1266
        %v1268 = vlaneseq
        %v1269 = vshrl.u32 %v1268, 7
        %v1270 = vsub.s32 3, %v1269
        %v1271 = vrot.slane %v372, %v1270
        %1273 = vbcast.lane.b32.xlu0 %v1271, 256
        %v1274 = vpop.permute.xlu0 %1273
        %s1276 = sor.u32 256, 8
        %1277 = vbcast.lane.b32.xlu0 %v1271, %s1276
        %v1278 = vpop.permute.xlu0 %1277
        %s1280 = sor.u32 256, 16
        %1281 = vbcast.lane.b32.xlu0 %v1271, %s1280
        %v1282 = vpop.permute.xlu0 %1281
        %s1284 = sor.u32 256, 24
        %1285 = vbcast.lane.b32.xlu0 %v1271, %s1284
        %v1286 = vpop.permute.xlu0 %1285
        %v1287 = vlaneseq
        %v1288 = vshrl.u32 %v1287, 7
        %v1289 = vsub.s32 4, %v1288
        %v1290 = vrot.slane %v372, %v1289
        %1292 = vbcast.lane.b32.xlu0 %v1290, 256
        %v1293 = vpop.permute.xlu0 %1292
        %s1295 = sor.u32 256, 8
        %1296 = vbcast.lane.b32.xlu0 %v1290, %s1295
        %v1297 = vpop.permute.xlu0 %1296
        %s1299 = sor.u32 256, 16
        %1300 = vbcast.lane.b32.xlu0 %v1290, %s1299
        %v1301 = vpop.permute.xlu0 %1300
        %s1303 = sor.u32 256, 24
        %1304 = vbcast.lane.b32.xlu0 %v1290, %s1303
        %v1305 = vpop.permute.xlu0 %1304
        %v1306 = vlaneseq
        %v1307 = vshrl.u32 %v1306, 7
        %v1308 = vsub.s32 5, %v1307
        %v1309 = vrot.slane %v372, %v1308
        %1311 = vbcast.lane.b32.xlu0 %v1309, 256
        %v1312 = vpop.permute.xlu0 %1311
        %s1314 = sor.u32 256, 8
        %1315 = vbcast.lane.b32.xlu0 %v1309, %s1314
        %v1316 = vpop.permute.xlu0 %1315
        %s1318 = sor.u32 256, 16
        %1319 = vbcast.lane.b32.xlu0 %v1309, %s1318
        %v1320 = vpop.permute.xlu0 %1319
        %s1322 = sor.u32 256, 24
        %1323 = vbcast.lane.b32.xlu0 %v1309, %s1322
        %v1324 = vpop.permute.xlu0 %1323
        %v1325 = vlaneseq
        %v1326 = vshrl.u32 %v1325, 7
        %v1327 = vsub.s32 6, %v1326
        %v1328 = vrot.slane %v372, %v1327
        %1330 = vbcast.lane.b32.xlu0 %v1328, 256
        %v1331 = vpop.permute.xlu0 %1330
        %s1333 = sor.u32 256, 8
        %1334 = vbcast.lane.b32.xlu0 %v1328, %s1333
        %v1335 = vpop.permute.xlu0 %1334
        %s1337 = sor.u32 256, 16
        %1338 = vbcast.lane.b32.xlu0 %v1328, %s1337
        %v1339 = vpop.permute.xlu0 %1338
        %s1341 = sor.u32 256, 24
        %1342 = vbcast.lane.b32.xlu0 %v1328, %s1341
        %v1343 = vpop.permute.xlu0 %1342
        %v1344 = vlaneseq
        %v1345 = vshrl.u32 %v1344, 7
        %v1346 = vsub.s32 7, %v1345
        %v1347 = vrot.slane %v372, %v1346
        %1349 = vbcast.lane.b32.xlu0 %v1347, 256
        %v1350 = vpop.permute.xlu0 %1349
        %s1352 = sor.u32 256, 8
        %1353 = vbcast.lane.b32.xlu0 %v1347, %s1352
        %v1354 = vpop.permute.xlu0 %1353
        %s1356 = sor.u32 256, 16
        %1357 = vbcast.lane.b32.xlu0 %v1347, %s1356
        %v1358 = vpop.permute.xlu0 %1357
        %s1360 = sor.u32 256, 24
        %1361 = vbcast.lane.b32.xlu0 %v1347, %s1360
        %v1362 = vpop.permute.xlu0 %1361
        %v1363 = vmul.f32 %v1217, %v901
        %v1364 = vmul.f32 %v1221, %v1004
        %v1365 = vmul.f32 %v1225, %v1107
        %v1366 = vmul.f32 %v1229, %v1210
        %v1367 = vmul.f32 %v1236, %v901
        %v1368 = vmul.f32 %v1240, %v1004
        %v1369 = vmul.f32 %v1244, %v1107
        %v1370 = vmul.f32 %v1248, %v1210
        %v1371 = vmul.f32 %v1255, %v901
        %v1372 = vmul.f32 %v1259, %v1004
        %v1373 = vmul.f32 %v1263, %v1107
        %v1374 = vmul.f32 %v1267, %v1210
        %v1375 = vmul.f32 %v1274, %v901
        %v1376 = vmul.f32 %v1278, %v1004
        %v1377 = vmul.f32 %v1282, %v1107
        %v1378 = vmul.f32 %v1286, %v1210
        %v1379 = vmul.f32 %v1293, %v901
        %v1380 = vmul.f32 %v1297, %v1004
        %v1381 = vmul.f32 %v1301, %v1107
        %v1382 = vmul.f32 %v1305, %v1210
        %v1383 = vmul.f32 %v1312, %v901
        %v1384 = vmul.f32 %v1316, %v1004
        %v1385 = vmul.f32 %v1320, %v1107
        %v1386 = vmul.f32 %v1324, %v1210
        %v1387 = vmul.f32 %v1331, %v901
        %v1388 = vmul.f32 %v1335, %v1004
        %v1389 = vmul.f32 %v1339, %v1107
        %v1390 = vmul.f32 %v1343, %v1210
        %v1391 = vmul.f32 %v1350, %v901
        %v1392 = vmul.f32 %v1354, %v1004
        %v1393 = vmul.f32 %v1358, %v1107
        %v1394 = vmul.f32 %v1362, %v1210
        %v1395 = vlaneseq
        %v1396 = vshrl.u32 %v1395, 7
        %v1397 = vsub.s32 0, %v1396
        %v1398 = vrot.slane %v374, %v1397
        %1400 = vbcast.lane.b32.xlu0 %v1398, 256
        %v1401 = vpop.permute.xlu0 %1400
        %s1403 = sor.u32 256, 8
        %1404 = vbcast.lane.b32.xlu0 %v1398, %s1403
        %v1405 = vpop.permute.xlu0 %1404
        %s1407 = sor.u32 256, 16
        %1408 = vbcast.lane.b32.xlu0 %v1398, %s1407
        %v1409 = vpop.permute.xlu0 %1408
        %s1411 = sor.u32 256, 24
        %1412 = vbcast.lane.b32.xlu0 %v1398, %s1411
        %v1413 = vpop.permute.xlu0 %1412
        %v1414 = vlaneseq
        %v1415 = vshrl.u32 %v1414, 7
        %v1416 = vsub.s32 1, %v1415
        %v1417 = vrot.slane %v374, %v1416
        %1419 = vbcast.lane.b32.xlu0 %v1417, 256
        %v1420 = vpop.permute.xlu0 %1419
        %s1422 = sor.u32 256, 8
        %1423 = vbcast.lane.b32.xlu0 %v1417, %s1422
        %v1424 = vpop.permute.xlu0 %1423
        %s1426 = sor.u32 256, 16
        %1427 = vbcast.lane.b32.xlu0 %v1417, %s1426
        %v1428 = vpop.permute.xlu0 %1427
        %s1430 = sor.u32 256, 24
        %1431 = vbcast.lane.b32.xlu0 %v1417, %s1430
        %v1432 = vpop.permute.xlu0 %1431
        %v1433 = vlaneseq
        %v1434 = vshrl.u32 %v1433, 7
        %v1435 = vsub.s32 2, %v1434
        %v1436 = vrot.slane %v374, %v1435
        %1438 = vbcast.lane.b32.xlu0 %v1436, 256
        %v1439 = vpop.permute.xlu0 %1438
        %s1441 = sor.u32 256, 8
        %1442 = vbcast.lane.b32.xlu0 %v1436, %s1441
        %v1443 = vpop.permute.xlu0 %1442
        %s1445 = sor.u32 256, 16
        %1446 = vbcast.lane.b32.xlu0 %v1436, %s1445
        %v1447 = vpop.permute.xlu0 %1446
        %s1449 = sor.u32 256, 24
        %1450 = vbcast.lane.b32.xlu0 %v1436, %s1449
        %v1451 = vpop.permute.xlu0 %1450
        %v1452 = vlaneseq
        %v1453 = vshrl.u32 %v1452, 7
        %v1454 = vsub.s32 3, %v1453
        %v1455 = vrot.slane %v374, %v1454
        %1457 = vbcast.lane.b32.xlu0 %v1455, 256
        %v1458 = vpop.permute.xlu0 %1457
        %s1460 = sor.u32 256, 8
        %1461 = vbcast.lane.b32.xlu0 %v1455, %s1460
        %v1462 = vpop.permute.xlu0 %1461
        %s1464 = sor.u32 256, 16
        %1465 = vbcast.lane.b32.xlu0 %v1455, %s1464
        %v1466 = vpop.permute.xlu0 %1465
        %s1468 = sor.u32 256, 24
        %1469 = vbcast.lane.b32.xlu0 %v1455, %s1468
        %v1470 = vpop.permute.xlu0 %1469
        %v1471 = vlaneseq
        %v1472 = vshrl.u32 %v1471, 7
        %v1473 = vsub.s32 4, %v1472
        %v1474 = vrot.slane %v374, %v1473
        %1476 = vbcast.lane.b32.xlu0 %v1474, 256
        %v1477 = vpop.permute.xlu0 %1476
        %s1479 = sor.u32 256, 8
        %1480 = vbcast.lane.b32.xlu0 %v1474, %s1479
        %v1481 = vpop.permute.xlu0 %1480
        %s1483 = sor.u32 256, 16
        %1484 = vbcast.lane.b32.xlu0 %v1474, %s1483
        %v1485 = vpop.permute.xlu0 %1484
        %s1487 = sor.u32 256, 24
        %1488 = vbcast.lane.b32.xlu0 %v1474, %s1487
        %v1489 = vpop.permute.xlu0 %1488
        %v1490 = vlaneseq
        %v1491 = vshrl.u32 %v1490, 7
        %v1492 = vsub.s32 5, %v1491
        %v1493 = vrot.slane %v374, %v1492
        %1495 = vbcast.lane.b32.xlu0 %v1493, 256
        %v1496 = vpop.permute.xlu0 %1495
        %s1498 = sor.u32 256, 8
        %1499 = vbcast.lane.b32.xlu0 %v1493, %s1498
        %v1500 = vpop.permute.xlu0 %1499
        %s1502 = sor.u32 256, 16
        %1503 = vbcast.lane.b32.xlu0 %v1493, %s1502
        %v1504 = vpop.permute.xlu0 %1503
        %s1506 = sor.u32 256, 24
        %1507 = vbcast.lane.b32.xlu0 %v1493, %s1506
        %v1508 = vpop.permute.xlu0 %1507
        %v1509 = vlaneseq
        %v1510 = vshrl.u32 %v1509, 7
        %v1511 = vsub.s32 6, %v1510
        %v1512 = vrot.slane %v374, %v1511
        %1514 = vbcast.lane.b32.xlu0 %v1512, 256
        %v1515 = vpop.permute.xlu0 %1514
        %s1517 = sor.u32 256, 8
        %1518 = vbcast.lane.b32.xlu0 %v1512, %s1517
        %v1519 = vpop.permute.xlu0 %1518
        %s1521 = sor.u32 256, 16
        %1522 = vbcast.lane.b32.xlu0 %v1512, %s1521
        %v1523 = vpop.permute.xlu0 %1522
        %s1525 = sor.u32 256, 24
        %1526 = vbcast.lane.b32.xlu0 %v1512, %s1525
        %v1527 = vpop.permute.xlu0 %1526
        %v1528 = vlaneseq
        %v1529 = vshrl.u32 %v1528, 7
        %v1530 = vsub.s32 7, %v1529
        %v1531 = vrot.slane %v374, %v1530
        %1533 = vbcast.lane.b32.xlu0 %v1531, 256
        %v1534 = vpop.permute.xlu0 %1533
        %s1536 = sor.u32 256, 8
        %1537 = vbcast.lane.b32.xlu0 %v1531, %s1536
        %v1538 = vpop.permute.xlu0 %1537
        %s1540 = sor.u32 256, 16
        %1541 = vbcast.lane.b32.xlu0 %v1531, %s1540
        %v1542 = vpop.permute.xlu0 %1541
        %s1544 = sor.u32 256, 24
        %1545 = vbcast.lane.b32.xlu0 %v1531, %s1544
        %v1546 = vpop.permute.xlu0 %1545
        %v1547 = vmul.f32 %v1401, %v486
        %v1548 = vmul.f32 %v1405, %v590
        %v1549 = vmul.f32 %v1409, %v694
        %v1550 = vmul.f32 %v1413, %v798
        %v1551 = vmul.f32 %v1420, %v486
        %v1552 = vmul.f32 %v1424, %v590
        %v1553 = vmul.f32 %v1428, %v694
        %v1554 = vmul.f32 %v1432, %v798
        %v1555 = vmul.f32 %v1439, %v486
        %v1556 = vmul.f32 %v1443, %v590
        %v1557 = vmul.f32 %v1447, %v694
        %v1558 = vmul.f32 %v1451, %v798
        %v1559 = vmul.f32 %v1458, %v486
        %v1560 = vmul.f32 %v1462, %v590
        %v1561 = vmul.f32 %v1466, %v694
        %v1562 = vmul.f32 %v1470, %v798
        %v1563 = vmul.f32 %v1477, %v486
        %v1564 = vmul.f32 %v1481, %v590
        %v1565 = vmul.f32 %v1485, %v694
        %v1566 = vmul.f32 %v1489, %v798
        %v1567 = vmul.f32 %v1496, %v486
        %v1568 = vmul.f32 %v1500, %v590
        %v1569 = vmul.f32 %v1504, %v694
        %v1570 = vmul.f32 %v1508, %v798
        %v1571 = vmul.f32 %v1515, %v486
        %v1572 = vmul.f32 %v1519, %v590
        %v1573 = vmul.f32 %v1523, %v694
        %v1574 = vmul.f32 %v1527, %v798
        %v1575 = vmul.f32 %v1534, %v486
        %v1576 = vmul.f32 %v1538, %v590
        %v1577 = vmul.f32 %v1542, %v694
        %v1578 = vmul.f32 %v1546, %v798
        %v1579 = vsub.f32 %v1363, %v1547
        %v1580 = vsub.f32 %v1364, %v1548
        %v1581 = vsub.f32 %v1365, %v1549
        %v1582 = vsub.f32 %v1366, %v1550
        %v1583 = vsub.f32 %v1367, %v1551
        %v1584 = vsub.f32 %v1368, %v1552
        %v1585 = vsub.f32 %v1369, %v1553
        %v1586 = vsub.f32 %v1370, %v1554
        %v1587 = vsub.f32 %v1371, %v1555
        %v1588 = vsub.f32 %v1372, %v1556
        %v1589 = vsub.f32 %v1373, %v1557
        %v1590 = vsub.f32 %v1374, %v1558
        %v1591 = vsub.f32 %v1375, %v1559
        %v1592 = vsub.f32 %v1376, %v1560
        %v1593 = vsub.f32 %v1377, %v1561
        %v1594 = vsub.f32 %v1378, %v1562
        %v1595 = vsub.f32 %v1379, %v1563
        %v1596 = vsub.f32 %v1380, %v1564
        %v1597 = vsub.f32 %v1381, %v1565
        %v1598 = vsub.f32 %v1382, %v1566
        %v1599 = vsub.f32 %v1383, %v1567
        %v1600 = vsub.f32 %v1384, %v1568
        %v1601 = vsub.f32 %v1385, %v1569
        %v1602 = vsub.f32 %v1386, %v1570
        %v1603 = vsub.f32 %v1387, %v1571
        %v1604 = vsub.f32 %v1388, %v1572
        %v1605 = vsub.f32 %v1389, %v1573
        %v1606 = vsub.f32 %v1390, %v1574
        %v1607 = vsub.f32 %v1391, %v1575
        %v1608 = vsub.f32 %v1392, %v1576
        %v1609 = vsub.f32 %v1393, %v1577
        %v1610 = vsub.f32 %v1394, %v1578
        %v1611 = vand.u32 2147483647, %v1579
        %v1612 = vand.u32 2147483647, %v1580
        %v1613 = vand.u32 2147483647, %v1581
        %v1614 = vand.u32 2147483647, %v1582
        %v1615 = vand.u32 2147483647, %v1583
        %v1616 = vand.u32 2147483647, %v1584
        %v1617 = vand.u32 2147483647, %v1585
        %v1618 = vand.u32 2147483647, %v1586
        %v1619 = vand.u32 2147483647, %v1587
        %v1620 = vand.u32 2147483647, %v1588
        %v1621 = vand.u32 2147483647, %v1589
        %v1622 = vand.u32 2147483647, %v1590
        %v1623 = vand.u32 2147483647, %v1591
        %v1624 = vand.u32 2147483647, %v1592
        %v1625 = vand.u32 2147483647, %v1593
        %v1626 = vand.u32 2147483647, %v1594
        %v1627 = vand.u32 2147483647, %v1595
        %v1628 = vand.u32 2147483647, %v1596
        %v1629 = vand.u32 2147483647, %v1597
        %v1630 = vand.u32 2147483647, %v1598
        %v1631 = vand.u32 2147483647, %v1599
        %v1632 = vand.u32 2147483647, %v1600
        %v1633 = vand.u32 2147483647, %v1601
        %v1634 = vand.u32 2147483647, %v1602
        %v1635 = vand.u32 2147483647, %v1603
        %v1636 = vand.u32 2147483647, %v1604
        %v1637 = vand.u32 2147483647, %v1605
        %v1638 = vand.u32 2147483647, %v1606
        %v1639 = vand.u32 2147483647, %v1607
        %v1640 = vand.u32 2147483647, %v1608
        %v1641 = vand.u32 2147483647, %v1609
        %v1642 = vand.u32 2147483647, %v1610
        %v1643 = vadd.f32 %v1611, %v1612
        %v1644 = vadd.f32 %v1643, %v1613
        %v1645 = vadd.f32 %v1644, %v1614
        %v1646 = vrot.slane %v1645, 4
        %v1647 = vadd.f32 %v1645, %v1646
        %v1648 = vrot.slane %v1647, 2
        %v1649 = vadd.f32 %v1647, %v1648
        %v1650 = vrot.slane %v1649, 1
        %v1651 = vadd.f32 %v1649, %v1650
        %v1652 = vadd.f32 %v1615, %v1616
        %v1653 = vadd.f32 %v1652, %v1617
        %v1654 = vadd.f32 %v1653, %v1618
        %v1655 = vrot.slane %v1654, 4
        %v1656 = vadd.f32 %v1654, %v1655
        %v1657 = vrot.slane %v1656, 2
        %v1658 = vadd.f32 %v1656, %v1657
        %v1659 = vrot.slane %v1658, 1
        %v1660 = vadd.f32 %v1658, %v1659
        %v1661 = vadd.f32 %v1619, %v1620
        %v1662 = vadd.f32 %v1661, %v1621
        %v1663 = vadd.f32 %v1662, %v1622
        %v1664 = vrot.slane %v1663, 4
        %v1665 = vadd.f32 %v1663, %v1664
        %v1666 = vrot.slane %v1665, 2
        %v1667 = vadd.f32 %v1665, %v1666
        %v1668 = vrot.slane %v1667, 1
        %v1669 = vadd.f32 %v1667, %v1668
        %v1670 = vadd.f32 %v1623, %v1624
        %v1671 = vadd.f32 %v1670, %v1625
        %v1672 = vadd.f32 %v1671, %v1626
        %v1673 = vrot.slane %v1672, 4
        %v1674 = vadd.f32 %v1672, %v1673
        %v1675 = vrot.slane %v1674, 2
        %v1676 = vadd.f32 %v1674, %v1675
        %v1677 = vrot.slane %v1676, 1
        %v1678 = vadd.f32 %v1676, %v1677
        %v1679 = vadd.f32 %v1627, %v1628
        %v1680 = vadd.f32 %v1679, %v1629
        %v1681 = vadd.f32 %v1680, %v1630
        %v1682 = vrot.slane %v1681, 4
        %v1683 = vadd.f32 %v1681, %v1682
        %v1684 = vrot.slane %v1683, 2
        %v1685 = vadd.f32 %v1683, %v1684
        %v1686 = vrot.slane %v1685, 1
        %v1687 = vadd.f32 %v1685, %v1686
        %v1688 = vadd.f32 %v1631, %v1632
        %v1689 = vadd.f32 %v1688, %v1633
        %v1690 = vadd.f32 %v1689, %v1634
        %v1691 = vrot.slane %v1690, 4
        %v1692 = vadd.f32 %v1690, %v1691
        %v1693 = vrot.slane %v1692, 2
        %v1694 = vadd.f32 %v1692, %v1693
        %v1695 = vrot.slane %v1694, 1
        %v1696 = vadd.f32 %v1694, %v1695
        %v1697 = vadd.f32 %v1635, %v1636
        %v1698 = vadd.f32 %v1697, %v1637
        %v1699 = vadd.f32 %v1698, %v1638
        %v1700 = vrot.slane %v1699, 4
        %v1701 = vadd.f32 %v1699, %v1700
        %v1702 = vrot.slane %v1701, 2
        %v1703 = vadd.f32 %v1701, %v1702
        %v1704 = vrot.slane %v1703, 1
        %v1705 = vadd.f32 %v1703, %v1704
        %v1706 = vadd.f32 %v1639, %v1640
        %v1707 = vadd.f32 %v1706, %v1641
        %v1708 = vadd.f32 %v1707, %v1642
        %v1709 = vrot.slane %v1708, 4
        %v1710 = vadd.f32 %v1708, %v1709
        %v1711 = vrot.slane %v1710, 2
        %v1712 = vadd.f32 %v1710, %v1711
        %v1713 = vrot.slane %v1712, 1
        %v1714 = vadd.f32 %v1712, %v1713
        %v1715 = vadd.f32 %v1651, 0.0
        %v1716 = vadd.f32 %v1660, 0.0
        %v1717 = vadd.f32 %v1669, 0.0
        %v1718 = vadd.f32 %v1678, 0.0
        %v1719 = vadd.f32 %v1687, 0.0
        %v1720 = vadd.f32 %v1696, 0.0
        %v1721 = vadd.f32 %v1705, 0.0
        %v1722 = vadd.f32 %v1714, 0.0
        %v1723 = vmul.f32 %v1715, 0.21875
        %v1724 = vmul.f32 %v1716, 0.21875
        %v1725 = vmul.f32 %v1717, 0.21875
        %v1726 = vmul.f32 %v1718, 0.21875
        %v1727 = vmul.f32 %v1719, 0.21875
        %v1728 = vmul.f32 %v1720, 0.21875
        %v1729 = vmul.f32 %v1721, 0.21875
        %v1730 = vmul.f32 %v1722, 0.21875
        %v1732 = vrot.slane %v371, 1
        %v1733 = vrot.slane %v371, 2
        %v1734 = vrot.slane %v371, 3
        %v1735 = vrot.slane %v371, 4
        %v1736 = vrot.slane %v371, 5
        %v1737 = vrot.slane %v371, 6
        %v1738 = vrot.slane %v371, 7
        %v1747 = vadd.f32 %v1723, %v371
        %v1748 = vadd.f32 %v1724, %v1732
        %v1749 = vadd.f32 %v1725, %v1733
        %v1750 = vadd.f32 %v1726, %v1734
        %v1751 = vadd.f32 %v1727, %v1735
        %v1752 = vadd.f32 %v1728, %v1736
        %v1753 = vadd.f32 %v1729, %v1737
        %v1754 = vadd.f32 %v1730, %v1738
        %v1755 = vsub.f32 12.0, %v1747
        %v1756 = vsub.f32 12.0, %v1748
        %v1757 = vsub.f32 12.0, %v1749
        %v1758 = vsub.f32 12.0, %v1750
        %v1759 = vsub.f32 12.0, %v1751
        %v1760 = vsub.f32 12.0, %v1752
        %v1761 = vsub.f32 12.0, %v1753
        %v1762 = vsub.f32 12.0, %v1754
        %v1763 = vsub.f32 0.0, %v1755
        %v1764 = vsub.f32 0.0, %v1756
        %v1765 = vsub.f32 0.0, %v1757
        %v1766 = vsub.f32 0.0, %v1758
        %v1767 = vsub.f32 0.0, %v1759
        %v1768 = vsub.f32 0.0, %v1760
        %v1769 = vsub.f32 0.0, %v1761
        %v1770 = vsub.f32 0.0, %v1762
        %v1771 = vmul.f32 %v1763, 1.442695
        %v1772 = vpow.pop %v1771
        %v1773 = vmul.f32 %v1764, 1.442695
        %v1774 = vpow.pop %v1773
        %v1775 = vmul.f32 %v1765, 1.442695
        %v1776 = vpow.pop %v1775
        %v1777 = vmul.f32 %v1766, 1.442695
        %v1778 = vpow.pop %v1777
        %v1779 = vmul.f32 %v1767, 1.442695
        %v1780 = vpow.pop %v1779
        %v1781 = vmul.f32 %v1768, 1.442695
        %v1782 = vpow.pop %v1781
        %v1783 = vmul.f32 %v1769, 1.442695
        %v1784 = vpow.pop %v1783
        %v1785 = vmul.f32 %v1770, 1.442695
        %v1786 = vpow.pop %v1785
        %v1787 = vadd.f32 %v1772, 1.0
        %v1788 = vadd.f32 %v1774, 1.0
        %v1789 = vadd.f32 %v1776, 1.0
        %v1790 = vadd.f32 %v1778, 1.0
        %v1791 = vadd.f32 %v1780, 1.0
        %v1792 = vadd.f32 %v1782, 1.0
        %v1793 = vadd.f32 %v1784, 1.0
        %v1794 = vadd.f32 %v1786, 1.0
        %v1795 = vrcp.pop %v1787
        %v1796 = vrcp.pop %v1788
        %v1797 = vrcp.pop %v1789
        %v1798 = vrcp.pop %v1790
        %v1799 = vrcp.pop %v1791
        %v1800 = vrcp.pop %v1792
        %v1801 = vrcp.pop %v1793
        %v1802 = vrcp.pop %v1794
        %v1811 = vrot.slane %v1796, 7
        %vm1812 = vcmask 1041409
        %v1813 = vsel %vm1812, %v1811, %v1795
        %v1814 = vrot.slane %v1797, 6
        %vm1815 = vcmask 1042434
        %v1816 = vsel %vm1815, %v1814, %v1813
        %v1817 = vrot.slane %v1798, 5
        %vm1818 = vcmask 1043459
        %v1819 = vsel %vm1818, %v1817, %v1816
        %v1820 = vrot.slane %v1799, 4
        %vm1821 = vcmask 1044484
        %v1822 = vsel %vm1821, %v1820, %v1819
        %v1823 = vrot.slane %v1800, 3
        %vm1824 = vcmask 1045509
        %v1825 = vsel %vm1824, %v1823, %v1822
        %v1826 = vrot.slane %v1801, 2
        %vm1827 = vcmask 1046534
        %v1828 = vsel %vm1827, %v1826, %v1825
        %v1829 = vrot.slane %v1802, 1
        %vm1830 = vcmask 1047559
        %v1831 = vsel %vm1830, %v1829, %v1828
        %1833 = vst [vmem:[%s196] sm:$0xff] %v1831
        %s1834 = sand.u32 %s94, 1
        %s1835 = scalar_lea.sflag [#allocation4], %s1834
        %s1836 = sand.u32 %s94, 1
        %s1837 = smul.addr %s1836, 8
        %s1838 = scalar_lea.vmem [#allocation7], %s1837
        // Predicated region
        $region37: #{tpu_custom_call.1} parent=27 // pred_check
          %p1839 = pneg %p104
        $region38: #{tpu_custom_call.1} parent=27 // pred_check_branch
          %1841 = sbr.rel (%p1839) target = $region40
        $region39: #{tpu_custom_call.1} parent=27 // pred_region
          %s1843 = ssub.s32 128, 128
          %1844 = vsyncadd %s1835, %s1843
          %s1845 = smul.addr %s24, 2
          %s1846 = sadd.s32 %s25, %s1845
          %s1847 = smul.addr %s1846, 128
          %s1848 = scalar_lea.hbm %s2, %s1847
          %s1850 = sshll.u32 %s1838, 4
          %s1851 = int_to_ptr.vmem [resolvable:$true] %s1850
          %1853 = dma.vmem_to_hbm [thread:$0]  %s1851, 128, %s1848, %s1835
        $region40: #{tpu_custom_call.1} parent=27 // pred_fallthru
          _
      $region28: #{tpu_custom_call.1} parent=5 // pred_fallthru
        _
      %p1854 = scmp.le.s32.totalorder 2, %s15
      // Predicated region
      $region41: #{tpu_custom_call.1} parent=5 // pred_check
        %p1855 = pneg %p1854
      $region42: #{tpu_custom_call.1} parent=5 // pred_check_branch
        %1857 = sbr.rel (%p1855) target = $region44
      $region43: #{tpu_custom_call.1} parent=5 // pred_region
        %s1858 = ssub.s32 %s15, 2
        // Predicated region
        $region45: #{tpu_custom_call.1} parent=43 // pred_check
          %p1859 = pneg %p110
        $region46: #{tpu_custom_call.1} parent=43 // pred_check_branch
          %1861 = sbr.rel (%p1859) target = $region48
        $region47: #{tpu_custom_call.1} parent=43 // pred_region
          %s1862 = sand.u32 %s95, 1
          %s1863 = scalar_lea.sflag [#allocation4], %s1862
          %s1864 = sand.u32 %s95, 1
          %s1865 = smul.addr %s1864, 8
          %s1866 = scalar_lea.vmem [#allocation7], %s1865
          %1867 = dma.done %s1863, 128
        $region48: #{tpu_custom_call.1} parent=43 // pred_fallthru
          _
      $region44: #{tpu_custom_call.1} parent=5 // pred_fallthru
        _
    $region6: #{tpu_custom_call.1} parent=1 // loop_footer
      %s19 = sadd.s32 1, %s15
    $region7: #{tpu_custom_call.1} parent=1 // loop_footer_branch
      %14 = sbr.rel target = $region3
    $region8: #{tpu_custom_call.1} parent=1 // loop_exit
      _
    %1868 = vsyncpa [#allocation3], 1
    %s1869 = scalar_lea.sflag [#allocation3], 1
    %1870 = vsyncpa %s1869, 1
    %1871 = vsyncpa [#allocation6], 1
    %s1872 = scalar_lea.sflag [#allocation6], 1
    %1873 = vsyncpa %s1872, 1
    %1874 = vsyncpa [#allocation4], 1
    %s1875 = scalar_lea.sflag [#allocation4], 1
    %1876 = vsyncpa %s1875, 1

</llo_original>
